<compile_context>
chip_gen: v6e
topology: v6e:2x2x1
jax: 0.10.0
libtpu: 0.0.40
codegen_flags: <defaults>
</compile_context>

<pallas_src>
import functools

import jax
import jax.numpy as jnp
from jax import lax
from jax.experimental import pallas as pl
from jax.experimental.pallas import tpu as pltpu


def _sigmoid(x):
    # Single-transcendental sigmoid: one EUP tanh, no exp + divide.
    return 0.5 * jnp.tanh(0.5 * x) + 0.5


def basicblock_kernel(x_ref, w1_ref, w2_ref, off_ref, caw1t_ref, caw2_ref,
                      sap_ref, out_ref, *, H, W):
    """Whole batch in one step; layout: channels-on-sublanes / spatial-on-lanes.

    x_ref    : (N, C, HW)  input, NCHW flattened (also the identity shortcut)
    w1_ref   : (C, C)      conv1 1x1 weight with bn1 scale folded in (out, in)
    w2_ref   : (C, C)      conv2 1x1 weight with bn2 scale folded in
    off_ref  : (C, 2)      folded bn offsets: column 0 = bn1, column 1 = bn2
    caw1t_ref: (C, Cmid)   channel-attention MLP fc1 weight, transposed
    caw2_ref : (C, Cmid)   channel-attention MLP fc2 weight
    sap_ref  : (18, HW)    spatial-attention planes: row c*9 + kh*3 + kw holds
                           conv_weight[c, kh, kw] * zero-pad-validity mask
    out_ref  : (N, C, HW)
    """
    N, C, HW = x_ref.shape
    Cmid = caw1t_ref.shape[1]
    K = 2 * N

    # ---- conv1 (1x1, bn1 folded) -> sigmoid ; conv2 (1x1, bn2 folded) --------
    xs = jnp.concatenate([x_ref[n] for n in range(N)], axis=1)        # (C, N*HW)
    h1 = _sigmoid(jnp.dot(w1_ref[...], xs, preferred_element_type=jnp.float32)
                  + off_ref[:, 0:1])
    u = (jnp.dot(w2_ref[...], h1, preferred_element_type=jnp.float32)
         + off_ref[:, 1:2])                                           # (C, N*HW)

    # ---- channel attention: sigmoid(MLP(avgpool) + MLP(maxpool)) -------------
    # pooled columns: [avg_0, max_0, avg_1, max_1, ...]   -> (C, 2N)
    cols = []
    for n in range(N):
        u_n = u[:, n * HW:(n + 1) * HW]
        cols.append(jnp.sum(u_n, axis=1, keepdims=True) * (1.0 / HW))
        cols.append(jnp.max(u_n, axis=1, keepdims=True))
    pooled = jnp.concatenate(cols, axis=1)                            # (C, 2N)

    # Shared MLP on VPU/XLU (keeps the tiny 2N-lane-wide matmuls off the MXU).
    att = jnp.zeros((C, K), jnp.float32)
    for m in range(Cmid):
        hid_m = jnp.maximum(
            jnp.sum(caw1t_ref[:, m:m + 1] * pooled, axis=0, keepdims=True), 0.0)
        att = att + caw2_ref[:, m:m + 1] * hid_m                      # (C, 2N)

    # ---- apply CA, pool over channels for spatial attention ------------------
    avg_rows, max_rows = [], []
    for n in range(N):
        ca_n = _sigmoid(att[:, 2 * n:2 * n + 1] + att[:, 2 * n + 1:2 * n + 2])
        v_n = u[:, n * HW:(n + 1) * HW] * ca_n                        # (C, HW)
        out_ref[n] = v_n        # stash v in the output VMEM block (vreg relief)
        avg_rows.append(jnp.sum(v_n, axis=0, keepdims=True) * (1.0 / C))
        max_rows.append(jnp.max(v_n, axis=0, keepdims=True))
    avg_m = jnp.concatenate(avg_rows, axis=0)                         # (N, HW)
    max_m = jnp.concatenate(max_rows, axis=0)                         # (N, HW)

    # ---- spatial attention: 3x3 same-padding conv, fully lane-dense ----------
    # out[p] = sum_{c,kh,kw} w[c,kh,kw] * map_c[p + (kh-1)*W + (kw-1)]
    # pltpu.roll supplies the shifted maps; the host-prebaked planes carry
    # weight * validity, so wrapped / out-of-bounds taps contribute exactly 0.
    acc = jnp.zeros((N, HW), jnp.float32)
    for kh in range(3):
        for kw in range(3):
            t = kh * 3 + kw
            shift = (-((kh - 1) * W + (kw - 1))) % HW
            sh_a = avg_m if shift == 0 else pltpu.roll(avg_m, shift, axis=1)
            sh_m = max_m if shift == 0 else pltpu.roll(max_m, shift, axis=1)
            acc = (acc + sh_a * sap_ref[t:t + 1, :]
                   + sh_m * sap_ref[9 + t:10 + t, :])
    sa = _sigmoid(acc)                                                # (N, HW)

    # ---- apply SA, identity shortcut (re-read x from VMEM), final sigmoid ----
    for n in range(N):
        out_ref[n] = _sigmoid(out_ref[n] * sa[n:n + 1, :] + x_ref[n])


def build_sa_planes(wsa, H, W):
    """(1,2,3,3) SpatialAttention conv weight -> (18, H*W) weight*validity planes."""
    hh = jnp.arange(H)
    ww = jnp.arange(W)
    rows = []
    for c in range(2):                      # channel 0 = avg map, 1 = max map
        for kh in range(3):
            for kw in range(3):
                vh = (hh + kh - 1 >= 0) & (hh + kh - 1 <= H - 1)
                vw = (ww + kw - 1 >= 0) & (ww + kw - 1 <= W - 1)
                valid = (vh[:, None] & vw[None, :]).astype(jnp.float32)
                rows.append(wsa[0, c, kh, kw] * valid.reshape(H * W))
    return jnp.stack(rows, axis=0)          # (18, H*W)


def fold_params(w1, g1, b1, rm1, rv1, w2, g2, b2, rm2, rv2, caw1, caw2, wsa,
                H, W, eps=1e-5):
    """PyTorch-layout params -> kernel params (eval-mode BN folded into convs)."""
    sc1 = g1 / jnp.sqrt(rv1 + eps)
    sc2 = g2 / jnp.sqrt(rv2 + eps)
    return (
        w1 * sc1[:, None],                                    # conv1 * bn1 scale
        w2 * sc2[:, None],                                    # conv2 * bn2 scale
        jnp.stack([b1 - rm1 * sc1, b2 - rm2 * sc2], axis=1),  # (C, 2) offsets
        caw1.T,                                               # (C, Cmid)
        caw2,                                                 # (C, Cmid)
        build_sa_planes(wsa, H, W),                           # (18, H*W)
    )


def basicblock_forward(x_nchw, kparams):
    """x_nchw: (N, C, H, W) float32 -> (N, C, H, W) float32."""
    w1f, w2f, off, caw1t, caw2, sa_planes = kparams
    N, C, H, W = x_nchw.shape
    HW = H * W
    x = x_nchw.reshape(N, C, HW)      # native NCHW, just flattened (no transpose)

    vmem = lambda: pl.BlockSpec(memory_space=pltpu.MemorySpace.VMEM)
    out = pl.pallas_call(
        functools.partial(basicblock_kernel, H=H, W=W),
        out_shape=jax.ShapeDtypeStruct((N, C, HW), jnp.float32),
        in_specs=[vmem() for _ in range(7)],
        out_specs=vmem(),
    )(x, w1f, w2f, off, caw1t, caw2, sa_planes)
    return out.reshape(N, C, H, W)


def basicblock_reference(x, pt):
    """Pure-JAX reference mirroring the PyTorch forward (NCHW, eval-mode BN)."""
    (w1, g1, b1, rm1, rv1, w2, g2, b2, rm2, rv2, caw1, caw2, wsa) = pt
    eps = 1e-5

    def conv1x1(z, w):                     # w: (O, I)
        return jnp.einsum('oi,nihw->nohw', w, z)

    def bn(z, g, b, rm, rv):
        sc = g / jnp.sqrt(rv + eps)
        return z * sc[None, :, None, None] + (b - rm * sc)[None, :, None, None]

    out = jax.nn.sigmoid(bn(conv1x1(x, w1), g1, b1, rm1, rv1))
    out = bn(conv1x1(out, w2), g2, b2, rm2, rv2)

    # ChannelAttention(64): sigmoid(MLP(avgpool) + MLP(maxpool))
    avg = out.mean(axis=(2, 3))            # (N, C)
    mx = out.max(axis=(2, 3))              # (N, C)
    mlp = lambda z: jnp.maximum(z @ caw1.T, 0.0) @ caw2.T
    ca = jax.nn.sigmoid(mlp(avg) + mlp(mx))[:, :, None, None]
    out = ca * out

    # SpatialAttention(kernel_size=3)
    s = jnp.concatenate([out.mean(axis=1, keepdims=True),
                         out.max(axis=1, keepdims=True)], axis=1)   # (N, 2, H, W)
    sl = lax.conv_general_dilated(s, wsa, (1, 1), ((1, 1), (1, 1)),
                                  dimension_numbers=('NCHW', 'OIHW', 'NCHW'))
    out = jax.nn.sigmoid(sl) * out

    out = out + x                          # identity shortcut
    return jax.nn.sigmoid(out)


if __name__ == "__main__":
    # BasicBlock0(in_planes=64, planes=64, stride=1); ChannelAttention ratio=16.
    N, C, H, W = 2, 64, 16, 16
    Cmid = 64 // 16

    key = jax.random.PRNGKey(0)
    ks = jax.random.split(key, 14)
    x = jax.random.normal(ks[0], (N, C, H, W), jnp.float32)

    # PyTorch-layout parameters (deterministic synthetic init, eval-mode BN stats)
    w1 = 0.1 * jax.random.normal(ks[1], (C, C), jnp.float32)       # conv1 (O, I)
    g1 = 1.0 + 0.1 * jax.random.normal(ks[2], (C,), jnp.float32)
    b1 = 0.1 * jax.random.normal(ks[3], (C,), jnp.float32)
    rm1 = 0.1 * jax.random.normal(ks[4], (C,), jnp.float32)
    rv1 = jax.random.uniform(ks[5], (C,), jnp.float32, 0.5, 1.5)
    w2 = 0.1 * jax.random.normal(ks[6], (C, C), jnp.float32)       # conv2 (O, I)
    g2 = 1.0 + 0.1 * jax.random.normal(ks[7], (C,), jnp.float32)
    b2 = 0.1 * jax.random.normal(ks[8], (C,), jnp.float32)
    rm2 = 0.1 * jax.random.normal(ks[9], (C,), jnp.float32)
    rv2 = jax.random.uniform(ks[10], (C,), jnp.float32, 0.5, 1.5)
    caw1 = 0.1 * jax.random.normal(ks[11], (Cmid, C), jnp.float32)    # CA MLP fc1
    caw2 = 0.1 * jax.random.normal(ks[12], (C, Cmid), jnp.float32)    # CA MLP fc2
    wsa = 0.1 * jax.random.normal(ks[13], (1, 2, 3, 3), jnp.float32)  # SA conv

    pt_params = (w1, g1, b1, rm1, rv1, w2, g2, b2, rm2, rv2, caw1, caw2, wsa)
    kparams = fold_params(w1, g1, b1, rm1, rv1, w2, g2, b2, rm2, rv2,
                          caw1, caw2, wsa, H, W)

    out = basicblock_forward(x, kparams)
    out = jax.block_until_ready(out)

    ref = basicblock_reference(x, pt_params)
    assert out.shape == ref.shape == (N, C, H, W)
    err = jnp.max(jnp.abs(out - ref))
    assert jnp.allclose(out, ref, atol=5e-3, rtol=5e-3), f"max abs err = {err}"

    print("KERNEL_OK")
</pallas_src>

<mosaic_0001>
module attributes {stable_mosaic.version = 11 : i64} {
  func.func @basicblock_kernel(%arg0: memref<2x64x256xf32, #tpu.memory_space<vmem>>, %arg1: memref<64x64xf32, #tpu.memory_space<vmem>>, %arg2: memref<64x64xf32, #tpu.memory_space<vmem>>, %arg3: memref<64x2xf32, #tpu.memory_space<vmem>>, %arg4: memref<64x4xf32, #tpu.memory_space<vmem>>, %arg5: memref<64x4xf32, #tpu.memory_space<vmem>>, %arg6: memref<18x256xf32, #tpu.memory_space<vmem>>, %arg7: memref<2x64x256xf32, #tpu.memory_space<vmem>>) attributes {dimension_semantics = [], scalar_prefetch = 0 : i64, scratch_operands = 0 : i64, tpu.core_type = #tpu.core_type<tc>} {
    %c0 = arith.constant 0 : index
    %c0_0 = arith.constant 0 : index
    %c0_1 = arith.constant 0 : index
    %0 = vector.load %arg0[%c0, %c0_0, %c0_1] : memref<2x64x256xf32, #tpu.memory_space<vmem>>, vector<1x64x256xf32>
    %1 = vector.shape_cast %0 : vector<1x64x256xf32> to vector<64x256xf32>
    %c1 = arith.constant 1 : index
    %c0_2 = arith.constant 0 : index
    %c0_3 = arith.constant 0 : index
    %2 = vector.load %arg0[%c1, %c0_2, %c0_3] : memref<2x64x256xf32, #tpu.memory_space<vmem>>, vector<1x64x256xf32>
    %3 = vector.shape_cast %2 : vector<1x64x256xf32> to vector<64x256xf32>
    %4 = tpu.concatenate %1, %3 in 1 : vector<64x256xf32>, vector<64x256xf32> -> vector<64x512xf32>
    %c0_4 = arith.constant 0 : index
    %c0_5 = arith.constant 0 : index
    %5 = vector.load %arg1[%c0_4, %c0_5] : memref<64x64xf32, #tpu.memory_space<vmem>>, vector<64x64xf32>
    %cst = arith.constant dense<0.000000e+00> : vector<64x512xf32>
    %6 = tpu.matmul %5, %4, %cst {dimension_numbers = #tpu.dot_dimension_numbers<[1], [0], [0], [1], [0, 0, 1, 1], [], []>} : vector<64x64xf32>, vector<64x512xf32>, vector<64x512xf32> -> vector<64x512xf32>
    %c0_6 = arith.constant 0 : index
    %c0_7 = arith.constant 0 : index
    %7 = vector.load %arg3[%c0_6, %c0_7] : memref<64x2xf32, #tpu.memory_space<vmem>>, vector<64x1xf32>
    %8 = vector.broadcast %7 : vector<64x1xf32> to vector<64x512xf32>
    %9 = arith.addf %6, %8 : vector<64x512xf32>
    %cst_8 = arith.constant 5.000000e-01 : f32
    %10 = vector.broadcast %cst_8 : f32 to vector<64x512xf32>
    %11 = arith.mulf %10, %9 : vector<64x512xf32>
    %12 = math.tanh %11 : vector<64x512xf32>
    %cst_9 = arith.constant 5.000000e-01 : f32
    %13 = vector.broadcast %cst_9 : f32 to vector<64x512xf32>
    %14 = arith.mulf %13, %12 : vector<64x512xf32>
    %cst_10 = arith.constant 5.000000e-01 : f32
    %15 = vector.broadcast %cst_10 : f32 to vector<64x512xf32>
    %16 = arith.addf %14, %15 : vector<64x512xf32>
    %c0_11 = arith.constant 0 : index
    %c0_12 = arith.constant 0 : index
    %17 = vector.load %arg2[%c0_11, %c0_12] : memref<64x64xf32, #tpu.memory_space<vmem>>, vector<64x64xf32>
    %cst_13 = arith.constant dense<0.000000e+00> : vector<64x512xf32>
    %18 = tpu.matmul %17, %16, %cst_13 {dimension_numbers = #tpu.dot_dimension_numbers<[1], [0], [0], [1], [0, 0, 1, 1], [], []>} : vector<64x64xf32>, vector<64x512xf32>, vector<64x512xf32> -> vector<64x512xf32>
    %c0_14 = arith.constant 0 : index
    %c1_15 = arith.constant 1 : index
    %19 = vector.load %arg3[%c0_14, %c1_15] : memref<64x2xf32, #tpu.memory_space<vmem>>, vector<64x1xf32>
    %20 = vector.broadcast %19 : vector<64x1xf32> to vector<64x512xf32>
    %21 = arith.addf %18, %20 : vector<64x512xf32>
    %22 = vector.extract_strided_slice %21 {offsets = [0, 0], sizes = [64, 256], strides = [1, 1]} : vector<64x512xf32> to vector<64x256xf32>
    %cst_16 = arith.constant dense<0.000000e+00> : vector<64xf32>
    %23 = vector.multi_reduction <add>, %22, %cst_16 [1] : vector<64x256xf32> to vector<64xf32>
    %24 = vector.shape_cast %23 : vector<64xf32> to vector<64x1xf32>
    %cst_17 = arith.constant 3.906250e-03 : f32
    %25 = vector.broadcast %cst_17 : f32 to vector<64x1xf32>
    %26 = arith.mulf %24, %25 : vector<64x1xf32>
    %cst_18 = arith.constant dense<0xFF800000> : vector<64xf32>
    %27 = vector.multi_reduction <maximumf>, %22, %cst_18 [1] : vector<64x256xf32> to vector<64xf32>
    %28 = vector.shape_cast %27 : vector<64xf32> to vector<64x1xf32>
    %29 = vector.extract_strided_slice %21 {offsets = [0, 256], sizes = [64, 256], strides = [1, 1]} : vector<64x512xf32> to vector<64x256xf32>
    %cst_19 = arith.constant dense<0.000000e+00> : vector<64xf32>
    %30 = vector.multi_reduction <add>, %29, %cst_19 [1] : vector<64x256xf32> to vector<64xf32>
    %31 = vector.shape_cast %30 : vector<64xf32> to vector<64x1xf32>
    %cst_20 = arith.constant 3.906250e-03 : f32
    %32 = vector.broadcast %cst_20 : f32 to vector<64x1xf32>
    %33 = arith.mulf %31, %32 : vector<64x1xf32>
    %cst_21 = arith.constant dense<0xFF800000> : vector<64xf32>
    %34 = vector.multi_reduction <maximumf>, %29, %cst_21 [1] : vector<64x256xf32> to vector<64xf32>
    %35 = vector.shape_cast %34 : vector<64xf32> to vector<64x1xf32>
    %36 = tpu.concatenate %26, %28, %33, %35 in 1 : vector<64x1xf32>, vector<64x1xf32>, vector<64x1xf32>, vector<64x1xf32> -> vector<64x4xf32>
    %cst_22 = arith.constant 0.000000e+00 : f32
    %37 = vector.broadcast %cst_22 : f32 to vector<64x4xf32>
    %c0_23 = arith.constant 0 : index
    %c0_24 = arith.constant 0 : index
    %38 = vector.load %arg4[%c0_23, %c0_24] : memref<64x4xf32, #tpu.memory_space<vmem>>, vector<64x1xf32>
    %39 = vector.broadcast %38 : vector<64x1xf32> to vector<64x4xf32>
    %40 = arith.mulf %39, %36 : vector<64x4xf32>
    %cst_25 = arith.constant dense<0.000000e+00> : vector<4xf32>
    %41 = vector.multi_reduction <add>, %40, %cst_25 [0] : vector<64x4xf32> to vector<4xf32>
    %42 = vector.shape_cast %41 : vector<4xf32> to vector<1x4xf32>
    %cst_26 = arith.constant 0.000000e+00 : f32
    %43 = vector.broadcast %cst_26 : f32 to vector<1x4xf32>
    %44 = arith.maximumf %42, %43 : vector<1x4xf32>
    %c0_27 = arith.constant 0 : index
    %c0_28 = arith.constant 0 : index
    %45 = vector.load %arg5[%c0_27, %c0_28] : memref<64x4xf32, #tpu.memory_space<vmem>>, vector<64x1xf32>
    %46 = vector.broadcast %45 : vector<64x1xf32> to vector<64x4xf32>
    %47 = vector.broadcast %44 : vector<1x4xf32> to vector<64x4xf32>
    %48 = arith.mulf %46, %47 : vector<64x4xf32>
    %49 = arith.addf %37, %48 : vector<64x4xf32>
    %c0_29 = arith.constant 0 : index
    %c1_30 = arith.constant 1 : index
    %50 = vector.load %arg4[%c0_29, %c1_30] : memref<64x4xf32, #tpu.memory_space<vmem>>, vector<64x1xf32>
    %51 = vector.broadcast %50 : vector<64x1xf32> to vector<64x4xf32>
    %52 = arith.mulf %51, %36 : vector<64x4xf32>
    %cst_31 = arith.constant dense<0.000000e+00> : vector<4xf32>
    %53 = vector.multi_reduction <add>, %52, %cst_31 [0] : vector<64x4xf32> to vector<4xf32>
    %54 = vector.shape_cast %53 : vector<4xf32> to vector<1x4xf32>
    %cst_32 = arith.constant 0.000000e+00 : f32
    %55 = vector.broadcast %cst_32 : f32 to vector<1x4xf32>
    %56 = arith.maximumf %54, %55 : vector<1x4xf32>
    %c0_33 = arith.constant 0 : index
    %c1_34 = arith.constant 1 : index
    %57 = vector.load %arg5[%c0_33, %c1_34] : memref<64x4xf32, #tpu.memory_space<vmem>>, vector<64x1xf32>
    %58 = vector.broadcast %57 : vector<64x1xf32> to vector<64x4xf32>
    %59 = vector.broadcast %56 : vector<1x4xf32> to vector<64x4xf32>
    %60 = arith.mulf %58, %59 : vector<64x4xf32>
    %61 = arith.addf %49, %60 : vector<64x4xf32>
    %c0_35 = arith.constant 0 : index
    %c2 = arith.constant 2 : index
    %62 = vector.load %arg4[%c0_35, %c2] : memref<64x4xf32, #tpu.memory_space<vmem>>, vector<64x1xf32>
    %63 = vector.broadcast %62 : vector<64x1xf32> to vector<64x4xf32>
    %64 = arith.mulf %63, %36 : vector<64x4xf32>
    %cst_36 = arith.constant dense<0.000000e+00> : vector<4xf32>
    %65 = vector.multi_reduction <add>, %64, %cst_36 [0] : vector<64x4xf32> to vector<4xf32>
    %66 = vector.shape_cast %65 : vector<4xf32> to vector<1x4xf32>
    %cst_37 = arith.constant 0.000000e+00 : f32
    %67 = vector.broadcast %cst_37 : f32 to vector<1x4xf32>
    %68 = arith.maximumf %66, %67 : vector<1x4xf32>
    %c0_38 = arith.constant 0 : index
    %c2_39 = arith.constant 2 : index
    %69 = vector.load %arg5[%c0_38, %c2_39] : memref<64x4xf32, #tpu.memory_space<vmem>>, vector<64x1xf32>
    %70 = vector.broadcast %69 : vector<64x1xf32> to vector<64x4xf32>
    %71 = vector.broadcast %68 : vector<1x4xf32> to vector<64x4xf32>
    %72 = arith.mulf %70, %71 : vector<64x4xf32>
    %73 = arith.addf %61, %72 : vector<64x4xf32>
    %c0_40 = arith.constant 0 : index
    %c3 = arith.constant 3 : index
    %74 = vector.load %arg4[%c0_40, %c3] : memref<64x4xf32, #tpu.memory_space<vmem>>, vector<64x1xf32>
    %75 = vector.broadcast %74 : vector<64x1xf32> to vector<64x4xf32>
    %76 = arith.mulf %75, %36 : vector<64x4xf32>
    %cst_41 = arith.constant dense<0.000000e+00> : vector<4xf32>
    %77 = vector.multi_reduction <add>, %76, %cst_41 [0] : vector<64x4xf32> to vector<4xf32>
    %78 = vector.shape_cast %77 : vector<4xf32> to vector<1x4xf32>
    %cst_42 = arith.constant 0.000000e+00 : f32
    %79 = vector.broadcast %cst_42 : f32 to vector<1x4xf32>
    %80 = arith.maximumf %78, %79 : vector<1x4xf32>
    %c0_43 = arith.constant 0 : index
    %c3_44 = arith.constant 3 : index
    %81 = vector.load %arg5[%c0_43, %c3_44] : memref<64x4xf32, #tpu.memory_space<vmem>>, vector<64x1xf32>
    %82 = vector.broadcast %81 : vector<64x1xf32> to vector<64x4xf32>
    %83 = vector.broadcast %80 : vector<1x4xf32> to vector<64x4xf32>
    %84 = arith.mulf %82, %83 : vector<64x4xf32>
    %85 = arith.addf %73, %84 : vector<64x4xf32>
    %86 = vector.extract_strided_slice %85 {offsets = [0, 0], sizes = [64, 1], strides = [1, 1]} : vector<64x4xf32> to vector<64x1xf32>
    %87 = vector.extract_strided_slice %85 {offsets = [0, 1], sizes = [64, 1], strides = [1, 1]} : vector<64x4xf32> to vector<64x1xf32>
    %88 = arith.addf %86, %87 : vector<64x1xf32>
    %cst_45 = arith.constant 5.000000e-01 : f32
    %89 = vector.broadcast %cst_45 : f32 to vector<64x1xf32>
    %90 = arith.mulf %89, %88 : vector<64x1xf32>
    %91 = math.tanh %90 : vector<64x1xf32>
    %cst_46 = arith.constant 5.000000e-01 : f32
    %92 = vector.broadcast %cst_46 : f32 to vector<64x1xf32>
    %93 = arith.mulf %92, %91 : vector<64x1xf32>
    %cst_47 = arith.constant 5.000000e-01 : f32
    %94 = vector.broadcast %cst_47 : f32 to vector<64x1xf32>
    %95 = arith.addf %93, %94 : vector<64x1xf32>
    %96 = vector.extract_strided_slice %21 {offsets = [0, 0], sizes = [64, 256], strides = [1, 1]} : vector<64x512xf32> to vector<64x256xf32>
    %97 = vector.broadcast %95 : vector<64x1xf32> to vector<64x256xf32>
    %98 = arith.mulf %96, %97 : vector<64x256xf32>
    %c0_48 = arith.constant 0 : index
    %c0_49 = arith.constant 0 : index
    %c0_50 = arith.constant 0 : index
    %99 = vector.load %arg7[%c0_48, %c0_49, %c0_50] : memref<2x64x256xf32, #tpu.memory_space<vmem>>, vector<1x64x256xf32>
    %100 = vector.shape_cast %99 : vector<1x64x256xf32> to vector<64x256xf32>
    %101 = vector.shape_cast %98 : vector<64x256xf32> to vector<1x64x256xf32>
    tpu.vector_store %arg7[%c0_48, %c0_49, %c0_50], %101 {strides = array<i32>} : memref<2x64x256xf32, #tpu.memory_space<vmem>>, vector<1x64x256xf32>,
    %cst_51 = arith.constant dense<0.000000e+00> : vector<256xf32>
    %102 = vector.multi_reduction <add>, %98, %cst_51 [0] : vector<64x256xf32> to vector<256xf32>
    %103 = vector.shape_cast %102 : vector<256xf32> to vector<1x256xf32>
    %cst_52 = arith.constant 1.562500e-02 : f32
    %104 = vector.broadcast %cst_52 : f32 to vector<1x256xf32>
    %105 = arith.mulf %103, %104 : vector<1x256xf32>
    %cst_53 = arith.constant dense<0xFF800000> : vector<256xf32>
    %106 = vector.multi_reduction <maximumf>, %98, %cst_53 [0] : vector<64x256xf32> to vector<256xf32>
    %107 = vector.shape_cast %106 : vector<256xf32> to vector<1x256xf32>
    %108 = vector.extract_strided_slice %85 {offsets = [0, 2], sizes = [64, 1], strides = [1, 1]} : vector<64x4xf32> to vector<64x1xf32>
    %109 = vector.extract_strided_slice %85 {offsets = [0, 3], sizes = [64, 1], strides = [1, 1]} : vector<64x4xf32> to vector<64x1xf32>
    %110 = arith.addf %108, %109 : vector<64x1xf32>
    %cst_54 = arith.constant 5.000000e-01 : f32
    %111 = vector.broadcast %cst_54 : f32 to vector<64x1xf32>
    %112 = arith.mulf %111, %110 : vector<64x1xf32>
    %113 = math.tanh %112 : vector<64x1xf32>
    %cst_55 = arith.constant 5.000000e-01 : f32
    %114 = vector.broadcast %cst_55 : f32 to vector<64x1xf32>
    %115 = arith.mulf %114, %113 : vector<64x1xf32>
    %cst_56 = arith.constant 5.000000e-01 : f32
    %116 = vector.broadcast %cst_56 : f32 to vector<64x1xf32>
    %117 = arith.addf %115, %116 : vector<64x1xf32>
    %118 = vector.extract_strided_slice %21 {offsets = [0, 256], sizes = [64, 256], strides = [1, 1]} : vector<64x512xf32> to vector<64x256xf32>
    %119 = vector.broadcast %117 : vector<64x1xf32> to vector<64x256xf32>
    %120 = arith.mulf %118, %119 : vector<64x256xf32>
    %c1_57 = arith.constant 1 : index
    %c0_58 = arith.constant 0 : index
    %c0_59 = arith.constant 0 : index
    %121 = vector.load %arg7[%c1_57, %c0_58, %c0_59] : memref<2x64x256xf32, #tpu.memory_space<vmem>>, vector<1x64x256xf32>
    %122 = vector.shape_cast %121 : vector<1x64x256xf32> to vector<64x256xf32>
    %123 = vector.shape_cast %120 : vector<64x256xf32> to vector<1x64x256xf32>
    tpu.vector_store %arg7[%c1_57, %c0_58, %c0_59], %123 {strides = array<i32>} : memref<2x64x256xf32, #tpu.memory_space<vmem>>, vector<1x64x256xf32>,
    %cst_60 = arith.constant dense<0.000000e+00> : vector<256xf32>
    %124 = vector.multi_reduction <add>, %120, %cst_60 [0] : vector<64x256xf32> to vector<256xf32>
    %125 = vector.shape_cast %124 : vector<256xf32> to vector<1x256xf32>
    %cst_61 = arith.constant 1.562500e-02 : f32
    %126 = vector.broadcast %cst_61 : f32 to vector<1x256xf32>
    %127 = arith.mulf %125, %126 : vector<1x256xf32>
    %cst_62 = arith.constant dense<0xFF800000> : vector<256xf32>
    %128 = vector.multi_reduction <maximumf>, %120, %cst_62 [0] : vector<64x256xf32> to vector<256xf32>
    %129 = vector.shape_cast %128 : vector<256xf32> to vector<1x256xf32>
    %130 = tpu.concatenate %105, %127 in 0 : vector<1x256xf32>, vector<1x256xf32> -> vector<2x256xf32>
    %131 = tpu.concatenate %107, %129 in 0 : vector<1x256xf32>, vector<1x256xf32> -> vector<2x256xf32>
    %cst_63 = arith.constant 0.000000e+00 : f32
    %132 = vector.broadcast %cst_63 : f32 to vector<2x256xf32>
    %c17_i32 = arith.constant 17 : i32
    %133 = tpu.dynamic_rotate %130 by %c17_i32 dim 1 : vector<2x256xf32>, i32 -> vector<2x256xf32>
    %c17_i32_64 = arith.constant 17 : i32
    %134 = tpu.dynamic_rotate %131 by %c17_i32_64 dim 1 : vector<2x256xf32>, i32 -> vector<2x256xf32>
    %c0_65 = arith.constant 0 : index
    %c0_66 = arith.constant 0 : index
    %135 = vector.load %arg6[%c0_65, %c0_66] : memref<18x256xf32, #tpu.memory_space<vmem>>, vector<1x256xf32>
    %136 = vector.broadcast %135 : vector<1x256xf32> to vector<2x256xf32>
    %137 = arith.mulf %133, %136 : vector<2x256xf32>
    %138 = arith.addf %132, %137 : vector<2x256xf32>
    %c9 = arith.constant 9 : index
    %c0_67 = arith.constant 0 : index
    %139 = vector.load %arg6[%c9, %c0_67] : memref<18x256xf32, #tpu.memory_space<vmem>>, vector<1x256xf32>
    %140 = vector.broadcast %139 : vector<1x256xf32> to vector<2x256xf32>
    %141 = arith.mulf %134, %140 : vector<2x256xf32>
    %142 = arith.addf %138, %141 : vector<2x256xf32>
    %c16_i32 = arith.constant 16 : i32
    %143 = tpu.dynamic_rotate %130 by %c16_i32 dim 1 : vector<2x256xf32>, i32 -> vector<2x256xf32>
    %c16_i32_68 = arith.constant 16 : i32
    %144 = tpu.dynamic_rotate %131 by %c16_i32_68 dim 1 : vector<2x256xf32>, i32 -> vector<2x256xf32>
    %c1_69 = arith.constant 1 : index
    %c0_70 = arith.constant 0 : index
    %145 = vector.load %arg6[%c1_69, %c0_70] : memref<18x256xf32, #tpu.memory_space<vmem>>, vector<1x256xf32>
    %146 = vector.broadcast %145 : vector<1x256xf32> to vector<2x256xf32>
    %147 = arith.mulf %143, %146 : vector<2x256xf32>
    %148 = arith.addf %142, %147 : vector<2x256xf32>
    %c10 = arith.constant 10 : index
    %c0_71 = arith.constant 0 : index
    %149 = vector.load %arg6[%c10, %c0_71] : memref<18x256xf32, #tpu.memory_space<vmem>>, vector<1x256xf32>
    %150 = vector.broadcast %149 : vector<1x256xf32> to vector<2x256xf32>
    %151 = arith.mulf %144, %150 : vector<2x256xf32>
    %152 = arith.addf %148, %151 : vector<2x256xf32>
    %c15_i32 = arith.constant 15 : i32
    %153 = tpu.dynamic_rotate %130 by %c15_i32 dim 1 : vector<2x256xf32>, i32 -> vector<2x256xf32>
    %c15_i32_72 = arith.constant 15 : i32
    %154 = tpu.dynamic_rotate %131 by %c15_i32_72 dim 1 : vector<2x256xf32>, i32 -> vector<2x256xf32>
    %c2_73 = arith.constant 2 : index
    %c0_74 = arith.constant 0 : index
    %155 = vector.load %arg6[%c2_73, %c0_74] : memref<18x256xf32, #tpu.memory_space<vmem>>, vector<1x256xf32>
    %156 = vector.broadcast %155 : vector<1x256xf32> to vector<2x256xf32>
    %157 = arith.mulf %153, %156 : vector<2x256xf32>
    %158 = arith.addf %152, %157 : vector<2x256xf32>
    %c11 = arith.constant 11 : index
    %c0_75 = arith.constant 0 : index
    %159 = vector.load %arg6[%c11, %c0_75] : memref<18x256xf32, #tpu.memory_space<vmem>>, vector<1x256xf32>
    %160 = vector.broadcast %159 : vector<1x256xf32> to vector<2x256xf32>
    %161 = arith.mulf %154, %160 : vector<2x256xf32>
    %162 = arith.addf %158, %161 : vector<2x256xf32>
    %c1_i32 = arith.constant 1 : i32
    %163 = tpu.dynamic_rotate %130 by %c1_i32 dim 1 : vector<2x256xf32>, i32 -> vector<2x256xf32>
    %c1_i32_76 = arith.constant 1 : i32
    %164 = tpu.dynamic_rotate %131 by %c1_i32_76 dim 1 : vector<2x256xf32>, i32 -> vector<2x256xf32>
    %c3_77 = arith.constant 3 : index
    %c0_78 = arith.constant 0 : index
    %165 = vector.load %arg6[%c3_77, %c0_78] : memref<18x256xf32, #tpu.memory_space<vmem>>, vector<1x256xf32>
    %166 = vector.broadcast %165 : vector<1x256xf32> to vector<2x256xf32>
    %167 = arith.mulf %163, %166 : vector<2x256xf32>
    %168 = arith.addf %162, %167 : vector<2x256xf32>
    %c12 = arith.constant 12 : index
    %c0_79 = arith.constant 0 : index
    %169 = vector.load %arg6[%c12, %c0_79] : memref<18x256xf32, #tpu.memory_space<vmem>>, vector<1x256xf32>
    %170 = vector.broadcast %169 : vector<1x256xf32> to vector<2x256xf32>
    %171 = arith.mulf %164, %170 : vector<2x256xf32>
    %172 = arith.addf %168, %171 : vector<2x256xf32>
    %c4 = arith.constant 4 : index
    %c0_80 = arith.constant 0 : index
    %173 = vector.load %arg6[%c4, %c0_80] : memref<18x256xf32, #tpu.memory_space<vmem>>, vector<1x256xf32>
    %174 = vector.broadcast %173 : vector<1x256xf32> to vector<2x256xf32>
    %175 = arith.mulf %130, %174 : vector<2x256xf32>
    %176 = arith.addf %172, %175 : vector<2x256xf32>
    %c13 = arith.constant 13 : index
    %c0_81 = arith.constant 0 : index
    %177 = vector.load %arg6[%c13, %c0_81] : memref<18x256xf32, #tpu.memory_space<vmem>>, vector<1x256xf32>
    %178 = vector.broadcast %177 : vector<1x256xf32> to vector<2x256xf32>
    %179 = arith.mulf %131, %178 : vector<2x256xf32>
    %180 = arith.addf %176, %179 : vector<2x256xf32>
    %c255_i32 = arith.constant 255 : i32
    %181 = tpu.dynamic_rotate %130 by %c255_i32 dim 1 : vector<2x256xf32>, i32 -> vector<2x256xf32>
    %c255_i32_82 = arith.constant 255 : i32
    %182 = tpu.dynamic_rotate %131 by %c255_i32_82 dim 1 : vector<2x256xf32>, i32 -> vector<2x256xf32>
    %c5 = arith.constant 5 : index
    %c0_83 = arith.constant 0 : index
    %183 = vector.load %arg6[%c5, %c0_83] : memref<18x256xf32, #tpu.memory_space<vmem>>, vector<1x256xf32>
    %184 = vector.broadcast %183 : vector<1x256xf32> to vector<2x256xf32>
    %185 = arith.mulf %181, %184 : vector<2x256xf32>
    %186 = arith.addf %180, %185 : vector<2x256xf32>
    %c14 = arith.constant 14 : index
    %c0_84 = arith.constant 0 : index
    %187 = vector.load %arg6[%c14, %c0_84] : memref<18x256xf32, #tpu.memory_space<vmem>>, vector<1x256xf32>
    %188 = vector.broadcast %187 : vector<1x256xf32> to vector<2x256xf32>
    %189 = arith.mulf %182, %188 : vector<2x256xf32>
    %190 = arith.addf %186, %189 : vector<2x256xf32>
    %c241_i32 = arith.constant 241 : i32
    %191 = tpu.dynamic_rotate %130 by %c241_i32 dim 1 : vector<2x256xf32>, i32 -> vector<2x256xf32>
    %c241_i32_85 = arith.constant 241 : i32
    %192 = tpu.dynamic_rotate %131 by %c241_i32_85 dim 1 : vector<2x256xf32>, i32 -> vector<2x256xf32>
    %c6 = arith.constant 6 : index
    %c0_86 = arith.constant 0 : index
    %193 = vector.load %arg6[%c6, %c0_86] : memref<18x256xf32, #tpu.memory_space<vmem>>, vector<1x256xf32>
    %194 = vector.broadcast %193 : vector<1x256xf32> to vector<2x256xf32>
    %195 = arith.mulf %191, %194 : vector<2x256xf32>
    %196 = arith.addf %190, %195 : vector<2x256xf32>
    %c15 = arith.constant 15 : index
    %c0_87 = arith.constant 0 : index
    %197 = vector.load %arg6[%c15, %c0_87] : memref<18x256xf32, #tpu.memory_space<vmem>>, vector<1x256xf32>
    %198 = vector.broadcast %197 : vector<1x256xf32> to vector<2x256xf32>
    %199 = arith.mulf %192, %198 : vector<2x256xf32>
    %200 = arith.addf %196, %199 : vector<2x256xf32>
    %c240_i32 = arith.constant 240 : i32
    %201 = tpu.dynamic_rotate %130 by %c240_i32 dim 1 : vector<2x256xf32>, i32 -> vector<2x256xf32>
    %c240_i32_88 = arith.constant 240 : i32
    %202 = tpu.dynamic_rotate %131 by %c240_i32_88 dim 1 : vector<2x256xf32>, i32 -> vector<2x256xf32>
    %c7 = arith.constant 7 : index
    %c0_89 = arith.constant 0 : index
    %203 = vector.load %arg6[%c7, %c0_89] : memref<18x256xf32, #tpu.memory_space<vmem>>, vector<1x256xf32>
    %204 = vector.broadcast %203 : vector<1x256xf32> to vector<2x256xf32>
    %205 = arith.mulf %201, %204 : vector<2x256xf32>
    %206 = arith.addf %200, %205 : vector<2x256xf32>
    %c16 = arith.constant 16 : index
    %c0_90 = arith.constant 0 : index
    %207 = vector.load %arg6[%c16, %c0_90] : memref<18x256xf32, #tpu.memory_space<vmem>>, vector<1x256xf32>
    %208 = vector.broadcast %207 : vector<1x256xf32> to vector<2x256xf32>
    %209 = arith.mulf %202, %208 : vector<2x256xf32>
    %210 = arith.addf %206, %209 : vector<2x256xf32>
    %c239_i32 = arith.constant 239 : i32
    %211 = tpu.dynamic_rotate %130 by %c239_i32 dim 1 : vector<2x256xf32>, i32 -> vector<2x256xf32>
    %c239_i32_91 = arith.constant 239 : i32
    %212 = tpu.dynamic_rotate %131 by %c239_i32_91 dim 1 : vector<2x256xf32>, i32 -> vector<2x256xf32>
    %c8 = arith.constant 8 : index
    %c0_92 = arith.constant 0 : index
    %213 = vector.load %arg6[%c8, %c0_92] : memref<18x256xf32, #tpu.memory_space<vmem>>, vector<1x256xf32>
    %214 = vector.broadcast %213 : vector<1x256xf32> to vector<2x256xf32>
    %215 = arith.mulf %211, %214 : vector<2x256xf32>
    %216 = arith.addf %210, %215 : vector<2x256xf32>
    %c17 = arith.constant 17 : index
    %c0_93 = arith.constant 0 : index
    %217 = vector.load %arg6[%c17, %c0_93] : memref<18x256xf32, #tpu.memory_space<vmem>>, vector<1x256xf32>
    %218 = vector.broadcast %217 : vector<1x256xf32> to vector<2x256xf32>
    %219 = arith.mulf %212, %218 : vector<2x256xf32>
    %220 = arith.addf %216, %219 : vector<2x256xf32>
    %cst_94 = arith.constant 5.000000e-01 : f32
    %221 = vector.broadcast %cst_94 : f32 to vector<2x256xf32>
    %222 = arith.mulf %221, %220 : vector<2x256xf32>
    %223 = math.tanh %222 : vector<2x256xf32>
    %cst_95 = arith.constant 5.000000e-01 : f32
    %224 = vector.broadcast %cst_95 : f32 to vector<2x256xf32>
    %225 = arith.mulf %224, %223 : vector<2x256xf32>
    %cst_96 = arith.constant 5.000000e-01 : f32
    %226 = vector.broadcast %cst_96 : f32 to vector<2x256xf32>
    %227 = arith.addf %225, %226 : vector<2x256xf32>
    %c0_97 = arith.constant 0 : index
    %c0_98 = arith.constant 0 : index
    %c0_99 = arith.constant 0 : index
    %228 = vector.load %arg7[%c0_97, %c0_98, %c0_99] : memref<2x64x256xf32, #tpu.memory_space<vmem>>, vector<1x64x256xf32>
    %229 = vector.shape_cast %228 : vector<1x64x256xf32> to vector<64x256xf32>
    %230 = vector.extract_strided_slice %227 {offsets = [0, 0], sizes = [1, 256], strides = [1, 1]} : vector<2x256xf32> to vector<1x256xf32>
    %231 = vector.broadcast %230 : vector<1x256xf32> to vector<64x256xf32>
    %232 = arith.mulf %229, %231 : vector<64x256xf32>
    %c0_100 = arith.constant 0 : index
    %c0_101 = arith.constant 0 : index
    %c0_102 = arith.constant 0 : index
    %233 = vector.load %arg0[%c0_100, %c0_101, %c0_102] : memref<2x64x256xf32, #tpu.memory_space<vmem>>, vector<1x64x256xf32>
    %234 = vector.shape_cast %233 : vector<1x64x256xf32> to vector<64x256xf32>
    %235 = arith.addf %232, %234 : vector<64x256xf32>
    %cst_103 = arith.constant 5.000000e-01 : f32
    %236 = vector.broadcast %cst_103 : f32 to vector<64x256xf32>
    %237 = arith.mulf %236, %235 : vector<64x256xf32>
    %238 = math.tanh %237 : vector<64x256xf32>
    %cst_104 = arith.constant 5.000000e-01 : f32
    %239 = vector.broadcast %cst_104 : f32 to vector<64x256xf32>
    %240 = arith.mulf %239, %238 : vector<64x256xf32>
    %cst_105 = arith.constant 5.000000e-01 : f32
    %241 = vector.broadcast %cst_105 : f32 to vector<64x256xf32>
    %242 = arith.addf %240, %241 : vector<64x256xf32>
    %c0_106 = arith.constant 0 : index
    %c0_107 = arith.constant 0 : index
    %c0_108 = arith.constant 0 : index
    %243 = vector.load %arg7[%c0_106, %c0_107, %c0_108] : memref<2x64x256xf32, #tpu.memory_space<vmem>>, vector<1x64x256xf32>
    %244 = vector.shape_cast %243 : vector<1x64x256xf32> to vector<64x256xf32>
    %245 = vector.shape_cast %242 : vector<64x256xf32> to vector<1x64x256xf32>
    tpu.vector_store %arg7[%c0_106, %c0_107, %c0_108], %245 {strides = array<i32>} : memref<2x64x256xf32, #tpu.memory_space<vmem>>, vector<1x64x256xf32>,
    %c1_109 = arith.constant 1 : index
    %c0_110 = arith.constant 0 : index
    %c0_111 = arith.constant 0 : index
    %246 = vector.load %arg7[%c1_109, %c0_110, %c0_111] : memref<2x64x256xf32, #tpu.memory_space<vmem>>, vector<1x64x256xf32>
    %247 = vector.shape_cast %246 : vector<1x64x256xf32> to vector<64x256xf32>
    %248 = vector.extract_strided_slice %227 {offsets = [1, 0], sizes = [1, 256], strides = [1, 1]} : vector<2x256xf32> to vector<1x256xf32>
    %249 = vector.broadcast %248 : vector<1x256xf32> to vector<64x256xf32>
    %250 = arith.mulf %247, %249 : vector<64x256xf32>
    %c1_112 = arith.constant 1 : index
    %c0_113 = arith.constant 0 : index
    %c0_114 = arith.constant 0 : index
    %251 = vector.load %arg0[%c1_112, %c0_113, %c0_114] : memref<2x64x256xf32, #tpu.memory_space<vmem>>, vector<1x64x256xf32>
    %252 = vector.shape_cast %251 : vector<1x64x256xf32> to vector<64x256xf32>
    %253 = arith.addf %250, %252 : vector<64x256xf32>
    %cst_115 = arith.constant 5.000000e-01 : f32
    %254 = vector.broadcast %cst_115 : f32 to vector<64x256xf32>
    %255 = arith.mulf %254, %253 : vector<64x256xf32>
    %256 = math.tanh %255 : vector<64x256xf32>
    %cst_116 = arith.constant 5.000000e-01 : f32
    %257 = vector.broadcast %cst_116 : f32 to vector<64x256xf32>
    %258 = arith.mulf %257, %256 : vector<64x256xf32>
    %cst_117 = arith.constant 5.000000e-01 : f32
    %259 = vector.broadcast %cst_117 : f32 to vector<64x256xf32>
    %260 = arith.addf %258, %259 : vector<64x256xf32>
    %c1_118 = arith.constant 1 : index
    %c0_119 = arith.constant 0 : index
    %c0_120 = arith.constant 0 : index
    %261 = vector.load %arg7[%c1_118, %c0_119, %c0_120] : memref<2x64x256xf32, #tpu.memory_space<vmem>>, vector<1x64x256xf32>
    %262 = vector.shape_cast %261 : vector<1x64x256xf32> to vector<64x256xf32>
    %263 = vector.shape_cast %260 : vector<64x256xf32> to vector<1x64x256xf32>
    tpu.vector_store %arg7[%c1_118, %c0_119, %c0_120], %263 {strides = array<i32>} : memref<2x64x256xf32, #tpu.memory_space<vmem>>, vector<1x64x256xf32>,
    return
  }
}

</mosaic_0001>

<llo_original>
// kernel: tpu_custom_call.1
$region0: #{tpu_custom_call.1}
  #allocation0 [shape = 'u32[]', space=smem, size = 0x4, offset = 0x4, fixed_abs, tag = 'smem constant byte address 0x4 - core index']
  #allocation1 [shape = 'u32[144,128]{1,0:T(1,128)}', space=vmem, size = 0x12000, scoped, tag = 'internal scratch']
  %s0 = inlined_call_operand.hbm [shape: f32[2,64,256], index: 0, kind: input, shape index: {}]
  %s1 = inlined_call_operand.vmem [shape: f32[64,64], index: 1, kind: input, shape index: {}]
  %s2 = inlined_call_operand.vmem [shape: f32[64,64], index: 2, kind: input, shape index: {}]
  %s3 = inlined_call_operand.vmem [shape: f32[64,2], index: 3, kind: input, shape index: {}]
  %s4 = inlined_call_operand.vmem [shape: f32[64,4], index: 4, kind: input, shape index: {}]
  %s5 = inlined_call_operand.vmem [shape: f32[64,4], index: 5, kind: input, shape index: {}]
  %s6 = inlined_call_operand.vmem [shape: f32[18,256], index: 6, kind: input, shape index: {}]
  %s7 = inlined_call_operand.hbm [shape: f32[2,64,256], index: 7, kind: output, shape index: {}]
  %s8 = sld [smem:[#allocation0]]
  $region42: #{tpu_custom_call.1} parent=0
    _
  %s10 = ssub.s32 1, %s8
  %s11 = scalar_select 0, %s10, %s8
  $region1: #{tpu_custom_call.1} parent=0
    #allocation2 [shape = 'u8[131072]{0}', space=vmem, size = 0x20000, scoped, tag = 'input window, operand 0, single buffered']
    #allocation3 [shape = 's32[1]{0}', space=sflag, size = 0x4, scoped, tag = 'scoped memory for tpu_custom_call.1']
    #allocation4 [shape = 's32[1]{0}', space=sflag, size = 0x4, scoped, tag = 'scoped memory for tpu_custom_call.1']
    #allocation5 [shape = 'u8[131072]{0}', space=vmem, size = 0x20000, scoped, tag = 'output window, operand 0, single buffered']
    %12 = vsyncpa [#allocation3], 0
    %13 = vsyncpa [#allocation4], 0
    // Predicated region
    $region2: #{tpu_custom_call.1} parent=1 // pred_check
      _
    $region3: #{tpu_custom_call.1} parent=1 // pred_check_branch
      %15 = sbr.rel (0) target = $region5
    $region4: #{tpu_custom_call.1} parent=1 // pred_region
      %s17 = ssub.s32 4096, 4096
      %18 = vsyncadd [#allocation3], %s17
      %s19 = sshll.u32 [#allocation2], 4
      %s20 = int_to_ptr.vmem [resolvable:$true] %s19
      %25 = dma.hbm_to_vmem [thread:$0]  %s0, 4096, %s20, [#allocation3], 256, 256, 16
    $region5: #{tpu_custom_call.1} parent=1 // pred_fallthru
      _
    // Predicated region
    $region6: #{tpu_custom_call.1} parent=1 // pred_check
      _
    $region7: #{tpu_custom_call.1} parent=1 // pred_check_branch
      %27 = sbr.rel (0) target = $region9
    $region8: #{tpu_custom_call.1} parent=1 // pred_region
      _
    $region9: #{tpu_custom_call.1} parent=1 // pred_fallthru
      _
    // Predicated region
    $region10: #{tpu_custom_call.1} parent=1 // pred_check
      _
    $region11: #{tpu_custom_call.1} parent=1 // pred_check_branch
      %29 = sbr.rel (0) target = $region13
    $region12: #{tpu_custom_call.1} parent=1 // pred_region
      _
    $region13: #{tpu_custom_call.1} parent=1 // pred_fallthru
      _
    // Predicated region
    $region14: #{tpu_custom_call.1} parent=1 // pred_check
      _
    $region15: #{tpu_custom_call.1} parent=1 // pred_check_branch
      %31 = sbr.rel (0) target = $region17
    $region16: #{tpu_custom_call.1} parent=1 // pred_region
      _
    $region17: #{tpu_custom_call.1} parent=1 // pred_fallthru
      _
    // Predicated region
    $region18: #{tpu_custom_call.1} parent=1 // pred_check
      _
    $region19: #{tpu_custom_call.1} parent=1 // pred_check_branch
      %33 = sbr.rel (0) target = $region21
    $region20: #{tpu_custom_call.1} parent=1 // pred_region
      _
    $region21: #{tpu_custom_call.1} parent=1 // pred_fallthru
      _
    // Predicated region
    $region22: #{tpu_custom_call.1} parent=1 // pred_check
      _
    $region23: #{tpu_custom_call.1} parent=1 // pred_check_branch
      %35 = sbr.rel (0) target = $region25
    $region24: #{tpu_custom_call.1} parent=1 // pred_region
      _
    $region25: #{tpu_custom_call.1} parent=1 // pred_fallthru
      _
    // Predicated region
    $region26: #{tpu_custom_call.1} parent=1 // pred_check
      _
    $region27: #{tpu_custom_call.1} parent=1 // pred_check_branch
      %37 = sbr.rel (0) target = $region29
    $region28: #{tpu_custom_call.1} parent=1 // pred_region
      _
    $region29: #{tpu_custom_call.1} parent=1 // pred_fallthru
      _
    // Predicated region
    $region30: #{tpu_custom_call.1} parent=1 // pred_check
      _
    $region31: #{tpu_custom_call.1} parent=1 // pred_check_branch
      %39 = sbr.rel (0) target = $region33
    $region32: #{tpu_custom_call.1} parent=1 // pred_region
      %40 = dma.done [#allocation3], 4096
    $region33: #{tpu_custom_call.1} parent=1 // pred_fallthru
      _
    %v41 = vld [vmem:[#allocation2] sm:$0xff]
    %v42 = vld [vmem:[#allocation2 + $0x8] sm:$0xff]
    %v43 = vld [vmem:[#allocation2 + $0x10] sm:$0xff]
    %v44 = vld [vmem:[#allocation2 + $0x18] sm:$0xff]
    %v45 = vld [vmem:[#allocation2 + $0x20] sm:$0xff]
    %v46 = vld [vmem:[#allocation2 + $0x28] sm:$0xff]
    %v47 = vld [vmem:[#allocation2 + $0x30] sm:$0xff]
    %v48 = vld [vmem:[#allocation2 + $0x38] sm:$0xff]
    %v49 = vld [vmem:[#allocation2 + $0x40] sm:$0xff]
    %v50 = vld [vmem:[#allocation2 + $0x48] sm:$0xff]
    %v51 = vld [vmem:[#allocation2 + $0x50] sm:$0xff]
    %v52 = vld [vmem:[#allocation2 + $0x58] sm:$0xff]
    %v53 = vld [vmem:[#allocation2 + $0x60] sm:$0xff]
    %v54 = vld [vmem:[#allocation2 + $0x68] sm:$0xff]
    %v55 = vld [vmem:[#allocation2 + $0x70] sm:$0xff]
    %v56 = vld [vmem:[#allocation2 + $0x78] sm:$0xff]
    %s57 = scalar_lea.vmem [#allocation2], 128
    %v58 = vld [vmem:[%s57] sm:$0xff]
    %v59 = vld [vmem:[%s57 + $0x8] sm:$0xff]
    %v60 = vld [vmem:[%s57 + $0x10] sm:$0xff]
    %v61 = vld [vmem:[%s57 + $0x18] sm:$0xff]
    %v62 = vld [vmem:[%s57 + $0x20] sm:$0xff]
    %v63 = vld [vmem:[%s57 + $0x28] sm:$0xff]
    %v64 = vld [vmem:[%s57 + $0x30] sm:$0xff]
    %v65 = vld [vmem:[%s57 + $0x38] sm:$0xff]
    %v66 = vld [vmem:[%s57 + $0x40] sm:$0xff]
    %v67 = vld [vmem:[%s57 + $0x48] sm:$0xff]
    %v68 = vld [vmem:[%s57 + $0x50] sm:$0xff]
    %v69 = vld [vmem:[%s57 + $0x58] sm:$0xff]
    %v70 = vld [vmem:[%s57 + $0x60] sm:$0xff]
    %v71 = vld [vmem:[%s57 + $0x68] sm:$0xff]
    %v72 = vld [vmem:[%s57 + $0x70] sm:$0xff]
    %v73 = vld [vmem:[%s57 + $0x78] sm:$0xff]
    %v74 = vld [vmem:[%s1] sm:$0xff]
    %v75 = vld [vmem:[%s1 + $0x8] sm:$0xff]
    %v76 = vld [vmem:[%s1 + $0x10] sm:$0xff]
    %v77 = vld [vmem:[%s1 + $0x18] sm:$0xff]
    %v78 = vld [vmem:[%s1 + $0x20] sm:$0xff]
    %v79 = vld [vmem:[%s1 + $0x28] sm:$0xff]
    %v80 = vld [vmem:[%s1 + $0x30] sm:$0xff]
    %v81 = vld [vmem:[%s1 + $0x38] sm:$0xff]
    %v82 = vld [vmem:[%s3] sm:$0xff]
    %v83 = vld [vmem:[%s3 + $0x8] sm:$0xff]
    %v84 = vld [vmem:[%s3 + $0x10] sm:$0xff]
    %v85 = vld [vmem:[%s3 + $0x18] sm:$0xff]
    %v86 = vld [vmem:[%s3 + $0x20] sm:$0xff]
    %v87 = vld [vmem:[%s3 + $0x28] sm:$0xff]
    %v88 = vld [vmem:[%s3 + $0x30] sm:$0xff]
    %v89 = vld [vmem:[%s3 + $0x38] sm:$0xff]
    %91 = vset.pattern.permute.xlu0 0
    %92 = vperm.xlu0 %91, %v82
    %v93 = vpop.permute.xlu0 %92
    %96 = vset.pattern.permute.xlu0 0
    %97 = vperm.xlu0 %96, %v83
    %v98 = vpop.permute.xlu0 %97
    %101 = vset.pattern.permute.xlu0 0
    %102 = vperm.xlu0 %101, %v84
    %v103 = vpop.permute.xlu0 %102
    %106 = vset.pattern.permute.xlu0 0
    %107 = vperm.xlu0 %106, %v85
    %v108 = vpop.permute.xlu0 %107
    %111 = vset.pattern.permute.xlu0 0
    %112 = vperm.xlu0 %111, %v86
    %v113 = vpop.permute.xlu0 %112
    %116 = vset.pattern.permute.xlu0 0
    %117 = vperm.xlu0 %116, %v87
    %v118 = vpop.permute.xlu0 %117
    %121 = vset.pattern.permute.xlu0 0
    %122 = vperm.xlu0 %121, %v88
    %v123 = vpop.permute.xlu0 %122
    %126 = vset.pattern.permute.xlu0 0
    %127 = vperm.xlu0 %126, %v89
    %v128 = vpop.permute.xlu0 %127
    %vm130 = vcmask 523264
    %v132 = vsel %vm130, %v74, 0
    %v135 = vsel %vm130, %v75, 0
    %v138 = vsel %vm130, %v76, 0
    %v141 = vsel %vm130, %v77, 0
    %v144 = vsel %vm130, %v78, 0
    %v147 = vsel %vm130, %v79, 0
    %v150 = vsel %vm130, %v80, 0
    %v153 = vsel %vm130, %v81, 0
    %155 = vmatprep.subr.mxu0 0.0
    %156 = vmatpush1.msra.mxu0 0.0
    %157 = vmatprep.subr.mxu0 0.0
    %158 = vmatpush1.msra.mxu0 0.0
    %159 = vmatprep.subr.mxu0 0.0
    %160 = vmatpush1.msra.mxu0 0.0
    %161 = vmatprep.subr.mxu0 0.0
    %162 = vmatpush1.msra.mxu0 0.0
    %163 = vmatprep.subr.mxu0 0.0
    %164 = vmatpush1.msra.mxu0 0.0
    %165 = vmatprep.subr.mxu0 0.0
    %166 = vmatpush1.msra.mxu0 0.0
    %167 = vmatprep.subr.mxu0 0.0
    %168 = vmatpush1.msra.mxu0 0.0
    %169 = vmatprep.subr.mxu0 0.0
    %170 = vmatpush1.msra.mxu0 0.0
    %171 = vmatprep.subr.mxu0 %v56
    %172 = vmatpush1.msra.mxu0 %v55
    %173 = vmatprep.subr.mxu0 %v54
    %174 = vmatpush1.msra.mxu0 %v53
    %175 = vmatprep.subr.mxu0 %v52
    %176 = vmatpush1.msra.mxu0 %v51
    %177 = vmatprep.subr.mxu0 %v50
    %178 = vmatpush1.msra.mxu0 %v49
    %179 = vmatprep.subr.mxu0 %v48
    %180 = vmatpush1.msra.mxu0 %v47
    %181 = vmatprep.subr.mxu0 %v46
    %182 = vmatpush1.msra.mxu0 %v45
    %183 = vmatprep.subr.mxu0 %v44
    %184 = vmatpush1.msra.mxu0 %v43
    %185 = vmatprep.subr.mxu0 %v42
    %186 = vmatpush1.msra.mxu0 %v41
    %187 = vmatprep.subr.mxu0 0.0
    %188 = vmatpush2.msra.mxu0 0.0
    %189 = vmatprep.subr.mxu0 0.0
    %190 = vmatpush2.msra.mxu0 0.0
    %191 = vmatprep.subr.mxu0 0.0
    %192 = vmatpush2.msra.mxu0 0.0
    %193 = vmatprep.subr.mxu0 0.0
    %194 = vmatpush2.msra.mxu0 0.0
    %195 = vmatprep.subr.mxu0 0.0
    %196 = vmatpush2.msra.mxu0 0.0
    %197 = vmatprep.subr.mxu0 0.0
    %198 = vmatpush2.msra.mxu0 0.0
    %199 = vmatprep.subr.mxu0 0.0
    %200 = vmatpush2.msra.mxu0 0.0
    %201 = vmatprep.subr.mxu0 0.0
    %202 = vmatpush2.msra.mxu0 0.0
    %203 = vmatprep.subr.mxu0 0.0
    %204 = vmatpush2.msra.mxu0 0.0
    %205 = vmatprep.subr.mxu0 0.0
    %206 = vmatpush2.msra.mxu0 0.0
    %207 = vmatprep.subr.mxu0 0.0
    %208 = vmatpush2.msra.mxu0 0.0
    %209 = vmatprep.subr.mxu0 0.0
    %210 = vmatpush2.msra.mxu0 0.0
    %211 = vmatprep.subr.mxu0 0.0
    %212 = vmatpush2.msra.mxu0 0.0
    %213 = vmatprep.subr.mxu0 0.0
    %214 = vmatpush2.msra.mxu0 0.0
    %215 = vmatprep.subr.mxu0 0.0
    %216 = vmatpush2.msra.mxu0 0.0
    %217 = vmatprep.subr.mxu0 0.0
    %218 = vmatpush2.msra.mxu0 0.0
    %219 = vmatprep.mubr.f32.mxu0 0.0
    %220 = vmatmul.mubr.f32.gmra.mxu0 %v132
    %v221 = vpop.f32.mrf.mxu0
    %v222 = vadd.f32 %v93, %v221
    %v223 = vpop.f32.mrf.mxu0
    %v224 = vadd.f32 %v93, %v223
    %225 = vmatprep.mubr.f32.mxu0 0.0
    %226 = vmatmul.mubr.f32.gmra.mxu0 %v135
    %v227 = vpop.f32.mrf.mxu0
    %v228 = vadd.f32 %v98, %v227
    %v229 = vpop.f32.mrf.mxu0
    %v230 = vadd.f32 %v98, %v229
    %231 = vmatprep.mubr.f32.mxu0 0.0
    %232 = vmatmul.mubr.f32.gmra.mxu0 %v138
    %v233 = vpop.f32.mrf.mxu0
    %v234 = vadd.f32 %v103, %v233
    %v235 = vpop.f32.mrf.mxu0
    %v236 = vadd.f32 %v103, %v235
    %237 = vmatprep.mubr.f32.mxu0 0.0
    %238 = vmatmul.mubr.f32.gmra.mxu0 %v141
    %v239 = vpop.f32.mrf.mxu0
    %v240 = vadd.f32 %v108, %v239
    %v241 = vpop.f32.mrf.mxu0
    %v242 = vadd.f32 %v108, %v241
    %243 = vmatprep.mubr.f32.mxu0 0.0
    %244 = vmatmul.mubr.f32.gmra.mxu0 %v144
    %v245 = vpop.f32.mrf.mxu0
    %v246 = vadd.f32 %v113, %v245
    %v247 = vpop.f32.mrf.mxu0
    %v248 = vadd.f32 %v113, %v247
    %249 = vmatprep.mubr.f32.mxu0 0.0
    %250 = vmatmul.mubr.f32.gmra.mxu0 %v147
    %v251 = vpop.f32.mrf.mxu0
    %v252 = vadd.f32 %v118, %v251
    %v253 = vpop.f32.mrf.mxu0
    %v254 = vadd.f32 %v118, %v253
    %255 = vmatprep.mubr.f32.mxu0 0.0
    %256 = vmatmul.mubr.f32.gmra.mxu0 %v150
    %v257 = vpop.f32.mrf.mxu0
    %v258 = vadd.f32 %v123, %v257
    %v259 = vpop.f32.mrf.mxu0
    %v260 = vadd.f32 %v123, %v259
    %261 = vmatprep.mubr.f32.mxu0 0.0
    %262 = vmatmul.mubr.f32.gmra.mxu0 %v153
    %v263 = vpop.f32.mrf.mxu0
    %v264 = vadd.f32 %v128, %v263
    %v265 = vpop.f32.mrf.mxu0
    %v266 = vadd.f32 %v128, %v265
    %267 = vdwg.mxu0
    %268 = vmatprep.subr.mxu0 0.0
    %269 = vmatpush1.msra.mxu0 0.0
    %270 = vmatprep.subr.mxu0 0.0
    %271 = vmatpush1.msra.mxu0 0.0
    %272 = vmatprep.subr.mxu0 0.0
    %273 = vmatpush1.msra.mxu0 0.0
    %274 = vmatprep.subr.mxu0 0.0
    %275 = vmatpush1.msra.mxu0 0.0
    %276 = vmatprep.subr.mxu0 0.0
    %277 = vmatpush1.msra.mxu0 0.0
    %278 = vmatprep.subr.mxu0 0.0
    %279 = vmatpush1.msra.mxu0 0.0
    %280 = vmatprep.subr.mxu0 0.0
    %281 = vmatpush1.msra.mxu0 0.0
    %282 = vmatprep.subr.mxu0 0.0
    %283 = vmatpush1.msra.mxu0 0.0
    %284 = vmatprep.subr.mxu0 %v73
    %285 = vmatpush1.msra.mxu0 %v72
    %286 = vmatprep.subr.mxu0 %v71
    %287 = vmatpush1.msra.mxu0 %v70
    %288 = vmatprep.subr.mxu0 %v69
    %289 = vmatpush1.msra.mxu0 %v68
    %290 = vmatprep.subr.mxu0 %v67
    %291 = vmatpush1.msra.mxu0 %v66
    %292 = vmatprep.subr.mxu0 %v65
    %293 = vmatpush1.msra.mxu0 %v64
    %294 = vmatprep.subr.mxu0 %v63
    %295 = vmatpush1.msra.mxu0 %v62
    %296 = vmatprep.subr.mxu0 %v61
    %297 = vmatpush1.msra.mxu0 %v60
    %298 = vmatprep.subr.mxu0 %v59
    %299 = vmatpush1.msra.mxu0 %v58
    %300 = vmatprep.subr.mxu0 0.0
    %301 = vmatpush2.msra.mxu0 0.0
    %302 = vmatprep.subr.mxu0 0.0
    %303 = vmatpush2.msra.mxu0 0.0
    %304 = vmatprep.subr.mxu0 0.0
    %305 = vmatpush2.msra.mxu0 0.0
    %306 = vmatprep.subr.mxu0 0.0
    %307 = vmatpush2.msra.mxu0 0.0
    %308 = vmatprep.subr.mxu0 0.0
    %309 = vmatpush2.msra.mxu0 0.0
    %310 = vmatprep.subr.mxu0 0.0
    %311 = vmatpush2.msra.mxu0 0.0
    %312 = vmatprep.subr.mxu0 0.0
    %313 = vmatpush2.msra.mxu0 0.0
    %314 = vmatprep.subr.mxu0 0.0
    %315 = vmatpush2.msra.mxu0 0.0
    %316 = vmatprep.subr.mxu0 0.0
    %317 = vmatpush2.msra.mxu0 0.0
    %318 = vmatprep.subr.mxu0 0.0
    %319 = vmatpush2.msra.mxu0 0.0
    %320 = vmatprep.subr.mxu0 0.0
    %321 = vmatpush2.msra.mxu0 0.0
    %322 = vmatprep.subr.mxu0 0.0
    %323 = vmatpush2.msra.mxu0 0.0
    %324 = vmatprep.subr.mxu0 0.0
    %325 = vmatpush2.msra.mxu0 0.0
    %326 = vmatprep.subr.mxu0 0.0
    %327 = vmatpush2.msra.mxu0 0.0
    %328 = vmatprep.subr.mxu0 0.0
    %329 = vmatpush2.msra.mxu0 0.0
    %330 = vmatprep.subr.mxu0 0.0
    %331 = vmatpush2.msra.mxu0 0.0
    %332 = vmatprep.mubr.f32.mxu0 0.0
    %333 = vmatmul.mubr.f32.gmra.mxu0 %v132
    %v334 = vpop.f32.mrf.mxu0
    %v335 = vadd.f32 %v93, %v334
    %v336 = vpop.f32.mrf.mxu0
    %v337 = vadd.f32 %v93, %v336
    %338 = vmatprep.mubr.f32.mxu0 0.0
    %339 = vmatmul.mubr.f32.gmra.mxu0 %v135
    %v340 = vpop.f32.mrf.mxu0
    %v341 = vadd.f32 %v98, %v340
    %v342 = vpop.f32.mrf.mxu0
    %v343 = vadd.f32 %v98, %v342
    %344 = vmatprep.mubr.f32.mxu0 0.0
    %345 = vmatmul.mubr.f32.gmra.mxu0 %v138
    %v346 = vpop.f32.mrf.mxu0
    %v347 = vadd.f32 %v103, %v346
    %v348 = vpop.f32.mrf.mxu0
    %v349 = vadd.f32 %v103, %v348
    %350 = vmatprep.mubr.f32.mxu0 0.0
    %351 = vmatmul.mubr.f32.gmra.mxu0 %v141
    %v352 = vpop.f32.mrf.mxu0
    %v353 = vadd.f32 %v108, %v352
    %v354 = vpop.f32.mrf.mxu0
    %v355 = vadd.f32 %v108, %v354
    %356 = vmatprep.mubr.f32.mxu0 0.0
    %357 = vmatmul.mubr.f32.gmra.mxu0 %v144
    %v358 = vpop.f32.mrf.mxu0
    %v359 = vadd.f32 %v113, %v358
    %v360 = vpop.f32.mrf.mxu0
    %v361 = vadd.f32 %v113, %v360
    %362 = vmatprep.mubr.f32.mxu0 0.0
    %363 = vmatmul.mubr.f32.gmra.mxu0 %v147
    %v364 = vpop.f32.mrf.mxu0
    %v365 = vadd.f32 %v118, %v364
    %v366 = vpop.f32.mrf.mxu0
    %v367 = vadd.f32 %v118, %v366
    %368 = vmatprep.mubr.f32.mxu0 0.0
    %369 = vmatmul.mubr.f32.gmra.mxu0 %v150
    %v370 = vpop.f32.mrf.mxu0
    %v371 = vadd.f32 %v123, %v370
    %v372 = vpop.f32.mrf.mxu0
    %v373 = vadd.f32 %v123, %v372
    %374 = vmatprep.mubr.f32.mxu0 0.0
    %375 = vmatmul.mubr.f32.gmra.mxu0 %v153
    %v376 = vpop.f32.mrf.mxu0
    %v377 = vadd.f32 %v128, %v376
    %v378 = vpop.f32.mrf.mxu0
    %v379 = vadd.f32 %v128, %v378
    %380 = vdwg.mxu0
    %v381 = vmul.f32 %v222, 0.5
    %v382 = vmul.f32 %v224, 0.5
    %v383 = vmul.f32 %v335, 0.5
    %v384 = vmul.f32 %v337, 0.5
    %v385 = vmul.f32 %v228, 0.5
    %v386 = vmul.f32 %v230, 0.5
    %v387 = vmul.f32 %v341, 0.5
    %v388 = vmul.f32 %v343, 0.5
    %v389 = vmul.f32 %v234, 0.5
    %v390 = vmul.f32 %v236, 0.5
    %v391 = vmul.f32 %v347, 0.5
    %v392 = vmul.f32 %v349, 0.5
    %v393 = vmul.f32 %v240, 0.5
    %v394 = vmul.f32 %v242, 0.5
    %v395 = vmul.f32 %v353, 0.5
    %v396 = vmul.f32 %v355, 0.5
    %v397 = vmul.f32 %v246, 0.5
    %v398 = vmul.f32 %v248, 0.5
    %v399 = vmul.f32 %v359, 0.5
    %v400 = vmul.f32 %v361, 0.5
    %v401 = vmul.f32 %v252, 0.5
    %v402 = vmul.f32 %v254, 0.5
    %v403 = vmul.f32 %v365, 0.5
    %v404 = vmul.f32 %v367, 0.5
    %v405 = vmul.f32 %v258, 0.5
    %v406 = vmul.f32 %v260, 0.5
    %v407 = vmul.f32 %v371, 0.5
    %v408 = vmul.f32 %v373, 0.5
    %v409 = vmul.f32 %v264, 0.5
    %v410 = vmul.f32 %v266, 0.5
    %v411 = vmul.f32 %v377, 0.5
    %v412 = vmul.f32 %v379, 0.5
    %v413 = vtanh.pop %v381
    %v414 = vtanh.pop %v382
    %v415 = vtanh.pop %v383
    %v416 = vtanh.pop %v384
    %v417 = vtanh.pop %v385
    %v418 = vtanh.pop %v386
    %v419 = vtanh.pop %v387
    %v420 = vtanh.pop %v388
    %v421 = vtanh.pop %v389
    %v422 = vtanh.pop %v390
    %v423 = vtanh.pop %v391
    %v424 = vtanh.pop %v392
    %v425 = vtanh.pop %v393
    %v426 = vtanh.pop %v394
    %v427 = vtanh.pop %v395
    %v428 = vtanh.pop %v396
    %v429 = vtanh.pop %v397
    %v430 = vtanh.pop %v398
    %v431 = vtanh.pop %v399
    %v432 = vtanh.pop %v400
    %v433 = vtanh.pop %v401
    %v434 = vtanh.pop %v402
    %v435 = vtanh.pop %v403
    %v436 = vtanh.pop %v404
    %v437 = vtanh.pop %v405
    %v438 = vtanh.pop %v406
    %v439 = vtanh.pop %v407
    %v440 = vtanh.pop %v408
    %v441 = vtanh.pop %v409
    %v442 = vtanh.pop %v410
    %v443 = vtanh.pop %v411
    %v444 = vtanh.pop %v412
    %v445 = vmul.f32 %v413, 0.5
    %v446 = vmul.f32 %v414, 0.5
    %v447 = vmul.f32 %v415, 0.5
    %v448 = vmul.f32 %v416, 0.5
    %v449 = vmul.f32 %v417, 0.5
    %v450 = vmul.f32 %v418, 0.5
    %v451 = vmul.f32 %v419, 0.5
    %v452 = vmul.f32 %v420, 0.5
    %v453 = vmul.f32 %v421, 0.5
    %v454 = vmul.f32 %v422, 0.5
    %v455 = vmul.f32 %v423, 0.5
    %v456 = vmul.f32 %v424, 0.5
    %v457 = vmul.f32 %v425, 0.5
    %v458 = vmul.f32 %v426, 0.5
    %v459 = vmul.f32 %v427, 0.5
    %v460 = vmul.f32 %v428, 0.5
    %v461 = vmul.f32 %v429, 0.5
    %v462 = vmul.f32 %v430, 0.5
    %v463 = vmul.f32 %v431, 0.5
    %v464 = vmul.f32 %v432, 0.5
    %v465 = vmul.f32 %v433, 0.5
    %v466 = vmul.f32 %v434, 0.5
    %v467 = vmul.f32 %v435, 0.5
    %v468 = vmul.f32 %v436, 0.5
    %v469 = vmul.f32 %v437, 0.5
    %v470 = vmul.f32 %v438, 0.5
    %v471 = vmul.f32 %v439, 0.5
    %v472 = vmul.f32 %v440, 0.5
    %v473 = vmul.f32 %v441, 0.5
    %v474 = vmul.f32 %v442, 0.5
    %v475 = vmul.f32 %v443, 0.5
    %v476 = vmul.f32 %v444, 0.5
    %v477 = vadd.f32 %v445, 0.5
    %v478 = vadd.f32 %v446, 0.5
    %v479 = vadd.f32 %v447, 0.5
    %v480 = vadd.f32 %v448, 0.5
    %v481 = vadd.f32 %v449, 0.5
    %v482 = vadd.f32 %v450, 0.5
    %v483 = vadd.f32 %v451, 0.5
    %v484 = vadd.f32 %v452, 0.5
    %v485 = vadd.f32 %v453, 0.5
    %v486 = vadd.f32 %v454, 0.5
    %v487 = vadd.f32 %v455, 0.5
    %v488 = vadd.f32 %v456, 0.5
    %v489 = vadd.f32 %v457, 0.5
    %v490 = vadd.f32 %v458, 0.5
    %v491 = vadd.f32 %v459, 0.5
    %v492 = vadd.f32 %v460, 0.5
    %v493 = vadd.f32 %v461, 0.5
    %v494 = vadd.f32 %v462, 0.5
    %v495 = vadd.f32 %v463, 0.5
    %v496 = vadd.f32 %v464, 0.5
    %v497 = vadd.f32 %v465, 0.5
    %v498 = vadd.f32 %v466, 0.5
    %v499 = vadd.f32 %v467, 0.5
    %v500 = vadd.f32 %v468, 0.5
    %v501 = vadd.f32 %v469, 0.5
    %v502 = vadd.f32 %v470, 0.5
    %v503 = vadd.f32 %v471, 0.5
    %v504 = vadd.f32 %v472, 0.5
    %v505 = vadd.f32 %v473, 0.5
    %v506 = vadd.f32 %v474, 0.5
    %v507 = vadd.f32 %v475, 0.5
    %v508 = vadd.f32 %v476, 0.5
    %v509 = vld [vmem:[%s2] sm:$0xff]
    %v510 = vld [vmem:[%s2 + $0x8] sm:$0xff]
    %v511 = vld [vmem:[%s2 + $0x10] sm:$0xff]
    %v512 = vld [vmem:[%s2 + $0x18] sm:$0xff]
    %v513 = vld [vmem:[%s2 + $0x20] sm:$0xff]
    %v514 = vld [vmem:[%s2 + $0x28] sm:$0xff]
    %v515 = vld [vmem:[%s2 + $0x30] sm:$0xff]
    %v516 = vld [vmem:[%s2 + $0x38] sm:$0xff]
    %517 = vset.pattern.permute.xlu0 1
    %518 = vperm.xlu0 %517, %v82
    %v519 = vpop.permute.xlu0 %518
    %521 = vset.pattern.permute.xlu0 1
    %522 = vperm.xlu0 %521, %v83
    %v523 = vpop.permute.xlu0 %522
    %525 = vset.pattern.permute.xlu0 1
    %526 = vperm.xlu0 %525, %v84
    %v527 = vpop.permute.xlu0 %526
    %529 = vset.pattern.permute.xlu0 1
    %530 = vperm.xlu0 %529, %v85
    %v531 = vpop.permute.xlu0 %530
    %533 = vset.pattern.permute.xlu0 1
    %534 = vperm.xlu0 %533, %v86
    %v535 = vpop.permute.xlu0 %534
    %537 = vset.pattern.permute.xlu0 1
    %538 = vperm.xlu0 %537, %v87
    %v539 = vpop.permute.xlu0 %538
    %541 = vset.pattern.permute.xlu0 1
    %542 = vperm.xlu0 %541, %v88
    %v543 = vpop.permute.xlu0 %542
    %545 = vset.pattern.permute.xlu0 1
    %546 = vperm.xlu0 %545, %v89
    %v547 = vpop.permute.xlu0 %546
    %v550 = vsel %vm130, %v509, 0
    %v553 = vsel %vm130, %v510, 0
    %v556 = vsel %vm130, %v511, 0
    %v559 = vsel %vm130, %v512, 0
    %v562 = vsel %vm130, %v513, 0
    %v565 = vsel %vm130, %v514, 0
    %v568 = vsel %vm130, %v515, 0
    %v571 = vsel %vm130, %v516, 0
    %573 = vmatprep.subr.mxu0 0.0
    %574 = vmatpush1.msra.mxu0 0.0
    %575 = vmatprep.subr.mxu0 0.0
    %576 = vmatpush1.msra.mxu0 0.0
    %577 = vmatprep.subr.mxu0 0.0
    %578 = vmatpush1.msra.mxu0 0.0
    %579 = vmatprep.subr.mxu0 0.0
    %580 = vmatpush1.msra.mxu0 0.0
    %581 = vmatprep.subr.mxu0 0.0
    %582 = vmatpush1.msra.mxu0 0.0
    %583 = vmatprep.subr.mxu0 0.0
    %584 = vmatpush1.msra.mxu0 0.0
    %585 = vmatprep.subr.mxu0 0.0
    %586 = vmatpush1.msra.mxu0 0.0
    %587 = vmatprep.subr.mxu0 0.0
    %588 = vmatpush1.msra.mxu0 0.0
    %589 = vmatprep.subr.mxu0 %v506
    %590 = vmatpush1.msra.mxu0 %v505
    %591 = vmatprep.subr.mxu0 %v502
    %592 = vmatpush1.msra.mxu0 %v501
    %593 = vmatprep.subr.mxu0 %v498
    %594 = vmatpush1.msra.mxu0 %v497
    %595 = vmatprep.subr.mxu0 %v494
    %596 = vmatpush1.msra.mxu0 %v493
    %597 = vmatprep.subr.mxu0 %v490
    %598 = vmatpush1.msra.mxu0 %v489
    %599 = vmatprep.subr.mxu0 %v486
    %600 = vmatpush1.msra.mxu0 %v485
    %601 = vmatprep.subr.mxu0 %v482
    %602 = vmatpush1.msra.mxu0 %v481
    %603 = vmatprep.subr.mxu0 %v478
    %604 = vmatpush1.msra.mxu0 %v477
    %605 = vmatprep.subr.mxu0 0.0
    %606 = vmatpush2.msra.mxu0 0.0
    %607 = vmatprep.subr.mxu0 0.0
    %608 = vmatpush2.msra.mxu0 0.0
    %609 = vmatprep.subr.mxu0 0.0
    %610 = vmatpush2.msra.mxu0 0.0
    %611 = vmatprep.subr.mxu0 0.0
    %612 = vmatpush2.msra.mxu0 0.0
    %613 = vmatprep.subr.mxu0 0.0
    %614 = vmatpush2.msra.mxu0 0.0
    %615 = vmatprep.subr.mxu0 0.0
    %616 = vmatpush2.msra.mxu0 0.0
    %617 = vmatprep.subr.mxu0 0.0
    %618 = vmatpush2.msra.mxu0 0.0
    %619 = vmatprep.subr.mxu0 0.0
    %620 = vmatpush2.msra.mxu0 0.0
    %621 = vmatprep.subr.mxu0 0.0
    %622 = vmatpush2.msra.mxu0 0.0
    %623 = vmatprep.subr.mxu0 0.0
    %624 = vmatpush2.msra.mxu0 0.0
    %625 = vmatprep.subr.mxu0 0.0
    %626 = vmatpush2.msra.mxu0 0.0
    %627 = vmatprep.subr.mxu0 0.0
    %628 = vmatpush2.msra.mxu0 0.0
    %629 = vmatprep.subr.mxu0 0.0
    %630 = vmatpush2.msra.mxu0 0.0
    %631 = vmatprep.subr.mxu0 0.0
    %632 = vmatpush2.msra.mxu0 0.0
    %633 = vmatprep.subr.mxu0 0.0
    %634 = vmatpush2.msra.mxu0 0.0
    %635 = vmatprep.subr.mxu0 0.0
    %636 = vmatpush2.msra.mxu0 0.0
    %637 = vmatprep.mubr.f32.mxu0 0.0
    %638 = vmatmul.mubr.f32.gmra.mxu0 %v550
    %v639 = vpop.f32.mrf.mxu0
    %v640 = vadd.f32 %v519, %v639
    %v641 = vpop.f32.mrf.mxu0
    %v642 = vadd.f32 %v519, %v641
    %643 = vmatprep.mubr.f32.mxu0 0.0
    %644 = vmatmul.mubr.f32.gmra.mxu0 %v553
    %v645 = vpop.f32.mrf.mxu0
    %v646 = vadd.f32 %v523, %v645
    %v647 = vpop.f32.mrf.mxu0
    %v648 = vadd.f32 %v523, %v647
    %649 = vmatprep.mubr.f32.mxu0 0.0
    %650 = vmatmul.mubr.f32.gmra.mxu0 %v556
    %v651 = vpop.f32.mrf.mxu0
    %v652 = vadd.f32 %v527, %v651
    %v653 = vpop.f32.mrf.mxu0
    %v654 = vadd.f32 %v527, %v653
    %655 = vmatprep.mubr.f32.mxu0 0.0
    %656 = vmatmul.mubr.f32.gmra.mxu0 %v559
    %v657 = vpop.f32.mrf.mxu0
    %v658 = vadd.f32 %v531, %v657
    %v659 = vpop.f32.mrf.mxu0
    %v660 = vadd.f32 %v531, %v659
    %661 = vmatprep.mubr.f32.mxu0 0.0
    %662 = vmatmul.mubr.f32.gmra.mxu0 %v562
    %v663 = vpop.f32.mrf.mxu0
    %v664 = vadd.f32 %v535, %v663
    %v665 = vpop.f32.mrf.mxu0
    %v666 = vadd.f32 %v535, %v665
    %667 = vmatprep.mubr.f32.mxu0 0.0
    %668 = vmatmul.mubr.f32.gmra.mxu0 %v565
    %v669 = vpop.f32.mrf.mxu0
    %v670 = vadd.f32 %v539, %v669
    %v671 = vpop.f32.mrf.mxu0
    %v672 = vadd.f32 %v539, %v671
    %673 = vmatprep.mubr.f32.mxu0 0.0
    %674 = vmatmul.mubr.f32.gmra.mxu0 %v568
    %v675 = vpop.f32.mrf.mxu0
    %v676 = vadd.f32 %v543, %v675
    %v677 = vpop.f32.mrf.mxu0
    %v678 = vadd.f32 %v543, %v677
    %679 = vmatprep.mubr.f32.mxu0 0.0
    %680 = vmatmul.mubr.f32.gmra.mxu0 %v571
    %v681 = vpop.f32.mrf.mxu0
    %v682 = vadd.f32 %v547, %v681
    %v683 = vpop.f32.mrf.mxu0
    %v684 = vadd.f32 %v547, %v683
    %685 = vdwg.mxu0
    %686 = vmatprep.subr.mxu0 0.0
    %687 = vmatpush1.msra.mxu0 0.0
    %688 = vmatprep.subr.mxu0 0.0
    %689 = vmatpush1.msra.mxu0 0.0
    %690 = vmatprep.subr.mxu0 0.0
    %691 = vmatpush1.msra.mxu0 0.0
    %692 = vmatprep.subr.mxu0 0.0
    %693 = vmatpush1.msra.mxu0 0.0
    %694 = vmatprep.subr.mxu0 0.0
    %695 = vmatpush1.msra.mxu0 0.0
    %696 = vmatprep.subr.mxu0 0.0
    %697 = vmatpush1.msra.mxu0 0.0
    %698 = vmatprep.subr.mxu0 0.0
    %699 = vmatpush1.msra.mxu0 0.0
    %700 = vmatprep.subr.mxu0 0.0
    %701 = vmatpush1.msra.mxu0 0.0
    %702 = vmatprep.subr.mxu0 %v508
    %703 = vmatpush1.msra.mxu0 %v507
    %704 = vmatprep.subr.mxu0 %v504
    %705 = vmatpush1.msra.mxu0 %v503
    %706 = vmatprep.subr.mxu0 %v500
    %707 = vmatpush1.msra.mxu0 %v499
    %708 = vmatprep.subr.mxu0 %v496
    %709 = vmatpush1.msra.mxu0 %v495
    %710 = vmatprep.subr.mxu0 %v492
    %711 = vmatpush1.msra.mxu0 %v491
    %712 = vmatprep.subr.mxu0 %v488
    %713 = vmatpush1.msra.mxu0 %v487
    %714 = vmatprep.subr.mxu0 %v484
    %715 = vmatpush1.msra.mxu0 %v483
    %716 = vmatprep.subr.mxu0 %v480
    %717 = vmatpush1.msra.mxu0 %v479
    %718 = vmatprep.subr.mxu0 0.0
    %719 = vmatpush2.msra.mxu0 0.0
    %720 = vmatprep.subr.mxu0 0.0
    %721 = vmatpush2.msra.mxu0 0.0
    %722 = vmatprep.subr.mxu0 0.0
    %723 = vmatpush2.msra.mxu0 0.0
    %724 = vmatprep.subr.mxu0 0.0
    %725 = vmatpush2.msra.mxu0 0.0
    %726 = vmatprep.subr.mxu0 0.0
    %727 = vmatpush2.msra.mxu0 0.0
    %728 = vmatprep.subr.mxu0 0.0
    %729 = vmatpush2.msra.mxu0 0.0
    %730 = vmatprep.subr.mxu0 0.0
    %731 = vmatpush2.msra.mxu0 0.0
    %732 = vmatprep.subr.mxu0 0.0
    %733 = vmatpush2.msra.mxu0 0.0
    %734 = vmatprep.subr.mxu0 0.0
    %735 = vmatpush2.msra.mxu0 0.0
    %736 = vmatprep.subr.mxu0 0.0
    %737 = vmatpush2.msra.mxu0 0.0
    %738 = vmatprep.subr.mxu0 0.0
    %739 = vmatpush2.msra.mxu0 0.0
    %740 = vmatprep.subr.mxu0 0.0
    %741 = vmatpush2.msra.mxu0 0.0
    %742 = vmatprep.subr.mxu0 0.0
    %743 = vmatpush2.msra.mxu0 0.0
    %744 = vmatprep.subr.mxu0 0.0
    %745 = vmatpush2.msra.mxu0 0.0
    %746 = vmatprep.subr.mxu0 0.0
    %747 = vmatpush2.msra.mxu0 0.0
    %748 = vmatprep.subr.mxu0 0.0
    %749 = vmatpush2.msra.mxu0 0.0
    %750 = vmatprep.mubr.f32.mxu0 0.0
    %751 = vmatmul.mubr.f32.gmra.mxu0 %v550
    %v752 = vpop.f32.mrf.mxu0
    %v753 = vadd.f32 %v519, %v752
    %v754 = vpop.f32.mrf.mxu0
    %v755 = vadd.f32 %v519, %v754
    %756 = vmatprep.mubr.f32.mxu0 0.0
    %757 = vmatmul.mubr.f32.gmra.mxu0 %v553
    %v758 = vpop.f32.mrf.mxu0
    %v759 = vadd.f32 %v523, %v758
    %v760 = vpop.f32.mrf.mxu0
    %v761 = vadd.f32 %v523, %v760
    %762 = vmatprep.mubr.f32.mxu0 0.0
    %763 = vmatmul.mubr.f32.gmra.mxu0 %v556
    %v764 = vpop.f32.mrf.mxu0
    %v765 = vadd.f32 %v527, %v764
    %v766 = vpop.f32.mrf.mxu0
    %v767 = vadd.f32 %v527, %v766
    %768 = vmatprep.mubr.f32.mxu0 0.0
    %769 = vmatmul.mubr.f32.gmra.mxu0 %v559
    %v770 = vpop.f32.mrf.mxu0
    %v771 = vadd.f32 %v531, %v770
    %v772 = vpop.f32.mrf.mxu0
    %v773 = vadd.f32 %v531, %v772
    %774 = vmatprep.mubr.f32.mxu0 0.0
    %775 = vmatmul.mubr.f32.gmra.mxu0 %v562
    %v776 = vpop.f32.mrf.mxu0
    %v777 = vadd.f32 %v535, %v776
    %v778 = vpop.f32.mrf.mxu0
    %v779 = vadd.f32 %v535, %v778
    %780 = vmatprep.mubr.f32.mxu0 0.0
    %781 = vmatmul.mubr.f32.gmra.mxu0 %v565
    %v782 = vpop.f32.mrf.mxu0
    %v783 = vadd.f32 %v539, %v782
    %v784 = vpop.f32.mrf.mxu0
    %v785 = vadd.f32 %v539, %v784
    %786 = vmatprep.mubr.f32.mxu0 0.0
    %787 = vmatmul.mubr.f32.gmra.mxu0 %v568
    %v788 = vpop.f32.mrf.mxu0
    %v789 = vadd.f32 %v543, %v788
    %v790 = vpop.f32.mrf.mxu0
    %v791 = vadd.f32 %v543, %v790
    %792 = vmatprep.mubr.f32.mxu0 0.0
    %793 = vmatmul.mubr.f32.gmra.mxu0 %v571
    %v794 = vpop.f32.mrf.mxu0
    %v795 = vadd.f32 %v547, %v794
    %v796 = vpop.f32.mrf.mxu0
    %v797 = vadd.f32 %v547, %v796
    %798 = vdwg.mxu0
    %v799 = vadd.f32 %v640, %v642
    %800 = vadd.xlane.f32.xlu0 %v799
    %v801 = vpop.xlane.xlu0 %800
    %v802 = vadd.f32 %v646, %v648
    %803 = vadd.xlane.f32.xlu0 %v802
    %v804 = vpop.xlane.xlu0 %803
    %v805 = vadd.f32 %v652, %v654
    %806 = vadd.xlane.f32.xlu0 %v805
    %v807 = vpop.xlane.xlu0 %806
    %v808 = vadd.f32 %v658, %v660
    %809 = vadd.xlane.f32.xlu0 %v808
    %v810 = vpop.xlane.xlu0 %809
    %v811 = vadd.f32 %v664, %v666
    %812 = vadd.xlane.f32.xlu0 %v811
    %v813 = vpop.xlane.xlu0 %812
    %v814 = vadd.f32 %v670, %v672
    %815 = vadd.xlane.f32.xlu0 %v814
    %v816 = vpop.xlane.xlu0 %815
    %v817 = vadd.f32 %v676, %v678
    %818 = vadd.xlane.f32.xlu0 %v817
    %v819 = vpop.xlane.xlu0 %818
    %v820 = vadd.f32 %v682, %v684
    %821 = vadd.xlane.f32.xlu0 %v820
    %v822 = vpop.xlane.xlu0 %821
    %v823 = vmul.f32 %v801, 0.00390625
    %v824 = vmul.f32 %v804, 0.00390625
    %v825 = vmul.f32 %v807, 0.00390625
    %v826 = vmul.f32 %v810, 0.00390625
    %v827 = vmul.f32 %v813, 0.00390625
    %v828 = vmul.f32 %v816, 0.00390625
    %v829 = vmul.f32 %v819, 0.00390625
    %v830 = vmul.f32 %v822, 0.00390625
    %v831 = vmax.f32 %v640, %v642
    %832 = vmax.xlane.f32.xlu0 %v831
    %v833 = vpop.xlane.xlu0 %832
    %v834 = vmax.f32 %v646, %v648
    %835 = vmax.xlane.f32.xlu0 %v834
    %v836 = vpop.xlane.xlu0 %835
    %v837 = vmax.f32 %v652, %v654
    %838 = vmax.xlane.f32.xlu0 %v837
    %v839 = vpop.xlane.xlu0 %838
    %v840 = vmax.f32 %v658, %v660
    %841 = vmax.xlane.f32.xlu0 %v840
    %v842 = vpop.xlane.xlu0 %841
    %v843 = vmax.f32 %v664, %v666
    %844 = vmax.xlane.f32.xlu0 %v843
    %v845 = vpop.xlane.xlu0 %844
    %v846 = vmax.f32 %v670, %v672
    %847 = vmax.xlane.f32.xlu0 %v846
    %v848 = vpop.xlane.xlu0 %847
    %v849 = vmax.f32 %v676, %v678
    %850 = vmax.xlane.f32.xlu0 %v849
    %v851 = vpop.xlane.xlu0 %850
    %v852 = vmax.f32 %v682, %v684
    %853 = vmax.xlane.f32.xlu0 %v852
    %v854 = vpop.xlane.xlu0 %853
    %v855 = vadd.f32 %v753, %v755
    %856 = vadd.xlane.f32.xlu0 %v855
    %v857 = vpop.xlane.xlu0 %856
    %v858 = vadd.f32 %v759, %v761
    %859 = vadd.xlane.f32.xlu0 %v858
    %v860 = vpop.xlane.xlu0 %859
    %v861 = vadd.f32 %v765, %v767
    %862 = vadd.xlane.f32.xlu0 %v861
    %v863 = vpop.xlane.xlu0 %862
    %v864 = vadd.f32 %v771, %v773
    %865 = vadd.xlane.f32.xlu0 %v864
    %v866 = vpop.xlane.xlu0 %865
    %v867 = vadd.f32 %v777, %v779
    %868 = vadd.xlane.f32.xlu0 %v867
    %v869 = vpop.xlane.xlu0 %868
    %v870 = vadd.f32 %v783, %v785
    %871 = vadd.xlane.f32.xlu0 %v870
    %v872 = vpop.xlane.xlu0 %871
    %v873 = vadd.f32 %v789, %v791
    %874 = vadd.xlane.f32.xlu0 %v873
    %v875 = vpop.xlane.xlu0 %874
    %v876 = vadd.f32 %v795, %v797
    %877 = vadd.xlane.f32.xlu0 %v876
    %v878 = vpop.xlane.xlu0 %877
    %v879 = vmul.f32 %v857, 0.00390625
    %v880 = vmul.f32 %v860, 0.00390625
    %v881 = vmul.f32 %v863, 0.00390625
    %v882 = vmul.f32 %v866, 0.00390625
    %v883 = vmul.f32 %v869, 0.00390625
    %v884 = vmul.f32 %v872, 0.00390625
    %v885 = vmul.f32 %v875, 0.00390625
    %v886 = vmul.f32 %v878, 0.00390625
    %v887 = vmax.f32 %v753, %v755
    %888 = vmax.xlane.f32.xlu0 %v887
    %v889 = vpop.xlane.xlu0 %888
    %v890 = vmax.f32 %v759, %v761
    %891 = vmax.xlane.f32.xlu0 %v890
    %v892 = vpop.xlane.xlu0 %891
    %v893 = vmax.f32 %v765, %v767
    %894 = vmax.xlane.f32.xlu0 %v893
    %v895 = vpop.xlane.xlu0 %894
    %v896 = vmax.f32 %v771, %v773
    %897 = vmax.xlane.f32.xlu0 %v896
    %v898 = vpop.xlane.xlu0 %897
    %v899 = vmax.f32 %v777, %v779
    %900 = vmax.xlane.f32.xlu0 %v899
    %v901 = vpop.xlane.xlu0 %900
    %v902 = vmax.f32 %v783, %v785
    %903 = vmax.xlane.f32.xlu0 %v902
    %v904 = vpop.xlane.xlu0 %903
    %v905 = vmax.f32 %v789, %v791
    %906 = vmax.xlane.f32.xlu0 %v905
    %v907 = vpop.xlane.xlu0 %906
    %v908 = vmax.f32 %v795, %v797
    %909 = vmax.xlane.f32.xlu0 %v908
    %v910 = vpop.xlane.xlu0 %909
    %vm911 = vcmask 7168
    %v912 = vsel %vm911, %v823, %v833
    %v913 = vsel %vm911, %v824, %v836
    %v914 = vsel %vm911, %v825, %v839
    %v915 = vsel %vm911, %v826, %v842
    %v916 = vsel %vm911, %v827, %v845
    %v917 = vsel %vm911, %v828, %v848
    %v918 = vsel %vm911, %v829, %v851
    %v919 = vsel %vm911, %v830, %v854
    %vm920 = vcmask 15360
    %v921 = vsel %vm920, %v912, %v879
    %v922 = vsel %vm920, %v913, %v880
    %v923 = vsel %vm920, %v914, %v881
    %v924 = vsel %vm920, %v915, %v882
    %v925 = vsel %vm920, %v916, %v883
    %v926 = vsel %vm920, %v917, %v884
    %v927 = vsel %vm920, %v918, %v885
    %v928 = vsel %vm920, %v919, %v886
    %vm929 = vcmask 23552
    %v930 = vsel %vm929, %v921, %v889
    %v931 = vsel %vm929, %v922, %v892
    %v932 = vsel %vm929, %v923, %v895
    %v933 = vsel %vm929, %v924, %v898
    %v934 = vsel %vm929, %v925, %v901
    %v935 = vsel %vm929, %v926, %v904
    %v936 = vsel %vm929, %v927, %v907
    %v937 = vsel %vm929, %v928, %v910
    %v938 = vld [vmem:[%s4] sm:$0xff]
    %v939 = vld [vmem:[%s4 + $0x8] sm:$0xff]
    %v940 = vld [vmem:[%s4 + $0x10] sm:$0xff]
    %v941 = vld [vmem:[%s4 + $0x18] sm:$0xff]
    %v942 = vld [vmem:[%s4 + $0x20] sm:$0xff]
    %v943 = vld [vmem:[%s4 + $0x28] sm:$0xff]
    %v944 = vld [vmem:[%s4 + $0x30] sm:$0xff]
    %v945 = vld [vmem:[%s4 + $0x38] sm:$0xff]
    %947 = vset.pattern.permute.xlu0 0
    %948 = vperm.xlu0 %947, %v938
    %v949 = vpop.permute.xlu0 %948
    %952 = vset.pattern.permute.xlu0 0
    %953 = vperm.xlu0 %952, %v939
    %v954 = vpop.permute.xlu0 %953
    %957 = vset.pattern.permute.xlu0 0
    %958 = vperm.xlu0 %957, %v940
    %v959 = vpop.permute.xlu0 %958
    %962 = vset.pattern.permute.xlu0 0
    %963 = vperm.xlu0 %962, %v941
    %v964 = vpop.permute.xlu0 %963
    %967 = vset.pattern.permute.xlu0 0
    %968 = vperm.xlu0 %967, %v942
    %v969 = vpop.permute.xlu0 %968
    %972 = vset.pattern.permute.xlu0 0
    %973 = vperm.xlu0 %972, %v943
    %v974 = vpop.permute.xlu0 %973
    %977 = vset.pattern.permute.xlu0 0
    %978 = vperm.xlu0 %977, %v944
    %v979 = vpop.permute.xlu0 %978
    %982 = vset.pattern.permute.xlu0 0
    %983 = vperm.xlu0 %982, %v945
    %v984 = vpop.permute.xlu0 %983
    %v986 = vmul.f32 %v949, %v930
    %v987 = vmul.f32 %v954, %v931
    %v988 = vmul.f32 %v959, %v932
    %v989 = vmul.f32 %v964, %v933
    %v990 = vmul.f32 %v969, %v934
    %v991 = vmul.f32 %v974, %v935
    %v992 = vmul.f32 %v979, %v936
    %v993 = vmul.f32 %v984, %v937
    %vm994 = vcmask 31744
    %v995 = vsel %vm994, %v986, 0.0
    %v996 = vsel %vm994, %v987, 0.0
    %v997 = vadd.f32 %v995, %v996
    %v998 = vsel %vm994, %v988, 0.0
    %v999 = vadd.f32 %v997, %v998
    %v1000 = vsel %vm994, %v989, 0.0
    %v1001 = vadd.f32 %v999, %v1000
    %v1002 = vsel %vm994, %v990, 0.0
    %v1003 = vadd.f32 %v1001, %v1002
    %v1004 = vsel %vm994, %v991, 0.0
    %v1005 = vadd.f32 %v1003, %v1004
    %v1006 = vsel %vm994, %v992, 0.0
    %v1007 = vadd.f32 %v1005, %v1006
    %v1008 = vsel %vm994, %v993, 0.0
    %v1009 = vadd.f32 %v1007, %v1008
    %v1010 = vrot.slane %v1009, 4
    %v1011 = vadd.f32 %v1009, %v1010
    %v1012 = vrot.slane %v1011, 2
    %v1013 = vadd.f32 %v1011, %v1012
    %v1014 = vrot.slane %v1013, 1
    %v1015 = vadd.f32 %v1013, %v1014
    %v1016 = vmax.f32 %v1015, 0.0
    %v1017 = vld [vmem:[%s5] sm:$0xff]
    %v1018 = vld [vmem:[%s5 + $0x8] sm:$0xff]
    %v1019 = vld [vmem:[%s5 + $0x10] sm:$0xff]
    %v1020 = vld [vmem:[%s5 + $0x18] sm:$0xff]
    %v1021 = vld [vmem:[%s5 + $0x20] sm:$0xff]
    %v1022 = vld [vmem:[%s5 + $0x28] sm:$0xff]
    %v1023 = vld [vmem:[%s5 + $0x30] sm:$0xff]
    %v1024 = vld [vmem:[%s5 + $0x38] sm:$0xff]
    %1026 = vset.pattern.permute.xlu0 0
    %1027 = vperm.xlu0 %1026, %v1017
    %v1028 = vpop.permute.xlu0 %1027
    %1031 = vset.pattern.permute.xlu0 0
    %1032 = vperm.xlu0 %1031, %v1018
    %v1033 = vpop.permute.xlu0 %1032
    %1036 = vset.pattern.permute.xlu0 0
    %1037 = vperm.xlu0 %1036, %v1019
    %v1038 = vpop.permute.xlu0 %1037
    %1041 = vset.pattern.permute.xlu0 0
    %1042 = vperm.xlu0 %1041, %v1020
    %v1043 = vpop.permute.xlu0 %1042
    %1046 = vset.pattern.permute.xlu0 0
    %1047 = vperm.xlu0 %1046, %v1021
    %v1048 = vpop.permute.xlu0 %1047
    %1051 = vset.pattern.permute.xlu0 0
    %1052 = vperm.xlu0 %1051, %v1022
    %v1053 = vpop.permute.xlu0 %1052
    %1056 = vset.pattern.permute.xlu0 0
    %1057 = vperm.xlu0 %1056, %v1023
    %v1058 = vpop.permute.xlu0 %1057
    %1061 = vset.pattern.permute.xlu0 0
    %1062 = vperm.xlu0 %1061, %v1024
    %v1063 = vpop.permute.xlu0 %1062
    %v1065 = vmul.f32 %v1028, %v1016
    %v1066 = vmul.f32 %v1033, %v1016
    %v1067 = vmul.f32 %v1038, %v1016
    %v1068 = vmul.f32 %v1043, %v1016
    %v1069 = vmul.f32 %v1048, %v1016
    %v1070 = vmul.f32 %v1053, %v1016
    %v1071 = vmul.f32 %v1058, %v1016
    %v1072 = vmul.f32 %v1063, %v1016
    %v1073 = vadd.f32 %v1065, 0.0
    %v1074 = vadd.f32 %v1066, 0.0
    %v1075 = vadd.f32 %v1067, 0.0
    %v1076 = vadd.f32 %v1068, 0.0
    %v1077 = vadd.f32 %v1069, 0.0
    %v1078 = vadd.f32 %v1070, 0.0
    %v1079 = vadd.f32 %v1071, 0.0
    %v1080 = vadd.f32 %v1072, 0.0
    %1081 = vset.pattern.permute.xlu0 1
    %1082 = vperm.xlu0 %1081, %v938
    %v1083 = vpop.permute.xlu0 %1082
    %1085 = vset.pattern.permute.xlu0 1
    %1086 = vperm.xlu0 %1085, %v939
    %v1087 = vpop.permute.xlu0 %1086
    %1089 = vset.pattern.permute.xlu0 1
    %1090 = vperm.xlu0 %1089, %v940
    %v1091 = vpop.permute.xlu0 %1090
    %1093 = vset.pattern.permute.xlu0 1
    %1094 = vperm.xlu0 %1093, %v941
    %v1095 = vpop.permute.xlu0 %1094
    %1097 = vset.pattern.permute.xlu0 1
    %1098 = vperm.xlu0 %1097, %v942
    %v1099 = vpop.permute.xlu0 %1098
    %1101 = vset.pattern.permute.xlu0 1
    %1102 = vperm.xlu0 %1101, %v943
    %v1103 = vpop.permute.xlu0 %1102
    %1105 = vset.pattern.permute.xlu0 1
    %1106 = vperm.xlu0 %1105, %v944
    %v1107 = vpop.permute.xlu0 %1106
    %1109 = vset.pattern.permute.xlu0 1
    %1110 = vperm.xlu0 %1109, %v945
    %v1111 = vpop.permute.xlu0 %1110
    %v1113 = vmul.f32 %v1083, %v930
    %v1114 = vmul.f32 %v1087, %v931
    %v1115 = vmul.f32 %v1091, %v932
    %v1116 = vmul.f32 %v1095, %v933
    %v1117 = vmul.f32 %v1099, %v934
    %v1118 = vmul.f32 %v1103, %v935
    %v1119 = vmul.f32 %v1107, %v936
    %v1120 = vmul.f32 %v1111, %v937
    %v1121 = vsel %vm994, %v1113, 0.0
    %v1122 = vsel %vm994, %v1114, 0.0
    %v1123 = vadd.f32 %v1121, %v1122
    %v1124 = vsel %vm994, %v1115, 0.0
    %v1125 = vadd.f32 %v1123, %v1124
    %v1126 = vsel %vm994, %v1116, 0.0
    %v1127 = vadd.f32 %v1125, %v1126
    %v1128 = vsel %vm994, %v1117, 0.0
    %v1129 = vadd.f32 %v1127, %v1128
    %v1130 = vsel %vm994, %v1118, 0.0
    %v1131 = vadd.f32 %v1129, %v1130
    %v1132 = vsel %vm994, %v1119, 0.0
    %v1133 = vadd.f32 %v1131, %v1132
    %v1134 = vsel %vm994, %v1120, 0.0
    %v1135 = vadd.f32 %v1133, %v1134
    %v1136 = vrot.slane %v1135, 4
    %v1137 = vadd.f32 %v1135, %v1136
    %v1138 = vrot.slane %v1137, 2
    %v1139 = vadd.f32 %v1137, %v1138
    %v1140 = vrot.slane %v1139, 1
    %v1141 = vadd.f32 %v1139, %v1140
    %v1142 = vmax.f32 %v1141, 0.0
    %1143 = vset.pattern.permute.xlu0 1
    %1144 = vperm.xlu0 %1143, %v1017
    %v1145 = vpop.permute.xlu0 %1144
    %1147 = vset.pattern.permute.xlu0 1
    %1148 = vperm.xlu0 %1147, %v1018
    %v1149 = vpop.permute.xlu0 %1148
    %1151 = vset.pattern.permute.xlu0 1
    %1152 = vperm.xlu0 %1151, %v1019
    %v1153 = vpop.permute.xlu0 %1152
    %1155 = vset.pattern.permute.xlu0 1
    %1156 = vperm.xlu0 %1155, %v1020
    %v1157 = vpop.permute.xlu0 %1156
    %1159 = vset.pattern.permute.xlu0 1
    %1160 = vperm.xlu0 %1159, %v1021
    %v1161 = vpop.permute.xlu0 %1160
    %1163 = vset.pattern.permute.xlu0 1
    %1164 = vperm.xlu0 %1163, %v1022
    %v1165 = vpop.permute.xlu0 %1164
    %1167 = vset.pattern.permute.xlu0 1
    %1168 = vperm.xlu0 %1167, %v1023
    %v1169 = vpop.permute.xlu0 %1168
    %1171 = vset.pattern.permute.xlu0 1
    %1172 = vperm.xlu0 %1171, %v1024
    %v1173 = vpop.permute.xlu0 %1172
    %v1175 = vmul.f32 %v1145, %v1142
    %v1176 = vmul.f32 %v1149, %v1142
    %v1177 = vmul.f32 %v1153, %v1142
    %v1178 = vmul.f32 %v1157, %v1142
    %v1179 = vmul.f32 %v1161, %v1142
    %v1180 = vmul.f32 %v1165, %v1142
    %v1181 = vmul.f32 %v1169, %v1142
    %v1182 = vmul.f32 %v1173, %v1142
    %v1183 = vadd.f32 %v1073, %v1175
    %v1184 = vadd.f32 %v1074, %v1176
    %v1185 = vadd.f32 %v1075, %v1177
    %v1186 = vadd.f32 %v1076, %v1178
    %v1187 = vadd.f32 %v1077, %v1179
    %v1188 = vadd.f32 %v1078, %v1180
    %v1189 = vadd.f32 %v1079, %v1181
    %v1190 = vadd.f32 %v1080, %v1182
    %1191 = vset.pattern.permute.xlu0 2
    %1192 = vperm.xlu0 %1191, %v938
    %v1193 = vpop.permute.xlu0 %1192
    %1195 = vset.pattern.permute.xlu0 2
    %1196 = vperm.xlu0 %1195, %v939
    %v1197 = vpop.permute.xlu0 %1196
    %1199 = vset.pattern.permute.xlu0 2
    %1200 = vperm.xlu0 %1199, %v940
    %v1201 = vpop.permute.xlu0 %1200
    %1203 = vset.pattern.permute.xlu0 2
    %1204 = vperm.xlu0 %1203, %v941
    %v1205 = vpop.permute.xlu0 %1204
    %1207 = vset.pattern.permute.xlu0 2
    %1208 = vperm.xlu0 %1207, %v942
    %v1209 = vpop.permute.xlu0 %1208
    %1211 = vset.pattern.permute.xlu0 2
    %1212 = vperm.xlu0 %1211, %v943
    %v1213 = vpop.permute.xlu0 %1212
    %1215 = vset.pattern.permute.xlu0 2
    %1216 = vperm.xlu0 %1215, %v944
    %v1217 = vpop.permute.xlu0 %1216
    %1219 = vset.pattern.permute.xlu0 2
    %1220 = vperm.xlu0 %1219, %v945
    %v1221 = vpop.permute.xlu0 %1220
    %v1223 = vmul.f32 %v1193, %v930
    %v1224 = vmul.f32 %v1197, %v931
    %v1225 = vmul.f32 %v1201, %v932
    %v1226 = vmul.f32 %v1205, %v933
    %v1227 = vmul.f32 %v1209, %v934
    %v1228 = vmul.f32 %v1213, %v935
    %v1229 = vmul.f32 %v1217, %v936
    %v1230 = vmul.f32 %v1221, %v937
    %v1231 = vsel %vm994, %v1223, 0.0
    %v1232 = vsel %vm994, %v1224, 0.0
    %v1233 = vadd.f32 %v1231, %v1232
    %v1234 = vsel %vm994, %v1225, 0.0
    %v1235 = vadd.f32 %v1233, %v1234
    %v1236 = vsel %vm994, %v1226, 0.0
    %v1237 = vadd.f32 %v1235, %v1236
    %v1238 = vsel %vm994, %v1227, 0.0
    %v1239 = vadd.f32 %v1237, %v1238
    %v1240 = vsel %vm994, %v1228, 0.0
    %v1241 = vadd.f32 %v1239, %v1240
    %v1242 = vsel %vm994, %v1229, 0.0
    %v1243 = vadd.f32 %v1241, %v1242
    %v1244 = vsel %vm994, %v1230, 0.0
    %v1245 = vadd.f32 %v1243, %v1244
    %v1246 = vrot.slane %v1245, 4
    %v1247 = vadd.f32 %v1245, %v1246
    %v1248 = vrot.slane %v1247, 2
    %v1249 = vadd.f32 %v1247, %v1248
    %v1250 = vrot.slane %v1249, 1
    %v1251 = vadd.f32 %v1249, %v1250
    %v1252 = vmax.f32 %v1251, 0.0
    %1253 = vset.pattern.permute.xlu0 2
    %1254 = vperm.xlu0 %1253, %v1017
    %v1255 = vpop.permute.xlu0 %1254
    %1257 = vset.pattern.permute.xlu0 2
    %1258 = vperm.xlu0 %1257, %v1018
    %v1259 = vpop.permute.xlu0 %1258
    %1261 = vset.pattern.permute.xlu0 2
    %1262 = vperm.xlu0 %1261, %v1019
    %v1263 = vpop.permute.xlu0 %1262
    %1265 = vset.pattern.permute.xlu0 2
    %1266 = vperm.xlu0 %1265, %v1020
    %v1267 = vpop.permute.xlu0 %1266
    %1269 = vset.pattern.permute.xlu0 2
    %1270 = vperm.xlu0 %1269, %v1021
    %v1271 = vpop.permute.xlu0 %1270
    %1273 = vset.pattern.permute.xlu0 2
    %1274 = vperm.xlu0 %1273, %v1022
    %v1275 = vpop.permute.xlu0 %1274
    %1277 = vset.pattern.permute.xlu0 2
    %1278 = vperm.xlu0 %1277, %v1023
    %v1279 = vpop.permute.xlu0 %1278
    %1281 = vset.pattern.permute.xlu0 2
    %1282 = vperm.xlu0 %1281, %v1024
    %v1283 = vpop.permute.xlu0 %1282
    %v1285 = vmul.f32 %v1255, %v1252
    %v1286 = vmul.f32 %v1259, %v1252
    %v1287 = vmul.f32 %v1263, %v1252
    %v1288 = vmul.f32 %v1267, %v1252
    %v1289 = vmul.f32 %v1271, %v1252
    %v1290 = vmul.f32 %v1275, %v1252
    %v1291 = vmul.f32 %v1279, %v1252
    %v1292 = vmul.f32 %v1283, %v1252
    %v1293 = vadd.f32 %v1183, %v1285
    %v1294 = vadd.f32 %v1184, %v1286
    %v1295 = vadd.f32 %v1185, %v1287
    %v1296 = vadd.f32 %v1186, %v1288
    %v1297 = vadd.f32 %v1187, %v1289
    %v1298 = vadd.f32 %v1188, %v1290
    %v1299 = vadd.f32 %v1189, %v1291
    %v1300 = vadd.f32 %v1190, %v1292
    %1301 = vset.pattern.permute.xlu0 3
    %1302 = vperm.xlu0 %1301, %v938
    %v1303 = vpop.permute.xlu0 %1302
    %1305 = vset.pattern.permute.xlu0 3
    %1306 = vperm.xlu0 %1305, %v939
    %v1307 = vpop.permute.xlu0 %1306
    %1309 = vset.pattern.permute.xlu0 3
    %1310 = vperm.xlu0 %1309, %v940
    %v1311 = vpop.permute.xlu0 %1310
    %1313 = vset.pattern.permute.xlu0 3
    %1314 = vperm.xlu0 %1313, %v941
    %v1315 = vpop.permute.xlu0 %1314
    %1317 = vset.pattern.permute.xlu0 3
    %1318 = vperm.xlu0 %1317, %v942
    %v1319 = vpop.permute.xlu0 %1318
    %1321 = vset.pattern.permute.xlu0 3
    %1322 = vperm.xlu0 %1321, %v943
    %v1323 = vpop.permute.xlu0 %1322
    %1325 = vset.pattern.permute.xlu0 3
    %1326 = vperm.xlu0 %1325, %v944
    %v1327 = vpop.permute.xlu0 %1326
    %1329 = vset.pattern.permute.xlu0 3
    %1330 = vperm.xlu0 %1329, %v945
    %v1331 = vpop.permute.xlu0 %1330
    %v1333 = vmul.f32 %v1303, %v930
    %v1334 = vmul.f32 %v1307, %v931
    %v1335 = vmul.f32 %v1311, %v932
    %v1336 = vmul.f32 %v1315, %v933
    %v1337 = vmul.f32 %v1319, %v934
    %v1338 = vmul.f32 %v1323, %v935
    %v1339 = vmul.f32 %v1327, %v936
    %v1340 = vmul.f32 %v1331, %v937
    %v1341 = vsel %vm994, %v1333, 0.0
    %v1342 = vsel %vm994, %v1334, 0.0
    %v1343 = vadd.f32 %v1341, %v1342
    %v1344 = vsel %vm994, %v1335, 0.0
    %v1345 = vadd.f32 %v1343, %v1344
    %v1346 = vsel %vm994, %v1336, 0.0
    %v1347 = vadd.f32 %v1345, %v1346
    %v1348 = vsel %vm994, %v1337, 0.0
    %v1349 = vadd.f32 %v1347, %v1348
    %v1350 = vsel %vm994, %v1338, 0.0
    %v1351 = vadd.f32 %v1349, %v1350
    %v1352 = vsel %vm994, %v1339, 0.0
    %v1353 = vadd.f32 %v1351, %v1352
    %v1354 = vsel %vm994, %v1340, 0.0
    %v1355 = vadd.f32 %v1353, %v1354
    %v1356 = vrot.slane %v1355, 4
    %v1357 = vadd.f32 %v1355, %v1356
    %v1358 = vrot.slane %v1357, 2
    %v1359 = vadd.f32 %v1357, %v1358
    %v1360 = vrot.slane %v1359, 1
    %v1361 = vadd.f32 %v1359, %v1360
    %v1362 = vmax.f32 %v1361, 0.0
    %1363 = vset.pattern.permute.xlu0 3
    %1364 = vperm.xlu0 %1363, %v1017
    %v1365 = vpop.permute.xlu0 %1364
    %1367 = vset.pattern.permute.xlu0 3
    %1368 = vperm.xlu0 %1367, %v1018
    %v1369 = vpop.permute.xlu0 %1368
    %1371 = vset.pattern.permute.xlu0 3
    %1372 = vperm.xlu0 %1371, %v1019
    %v1373 = vpop.permute.xlu0 %1372
    %1375 = vset.pattern.permute.xlu0 3
    %1376 = vperm.xlu0 %1375, %v1020
    %v1377 = vpop.permute.xlu0 %1376
    %1379 = vset.pattern.permute.xlu0 3
    %1380 = vperm.xlu0 %1379, %v1021
    %v1381 = vpop.permute.xlu0 %1380
    %1383 = vset.pattern.permute.xlu0 3
    %1384 = vperm.xlu0 %1383, %v1022
    %v1385 = vpop.permute.xlu0 %1384
    %1387 = vset.pattern.permute.xlu0 3
    %1388 = vperm.xlu0 %1387, %v1023
    %v1389 = vpop.permute.xlu0 %1388
    %1391 = vset.pattern.permute.xlu0 3
    %1392 = vperm.xlu0 %1391, %v1024
    %v1393 = vpop.permute.xlu0 %1392
    %v1395 = vmul.f32 %v1365, %v1362
    %v1396 = vmul.f32 %v1369, %v1362
    %v1397 = vmul.f32 %v1373, %v1362
    %v1398 = vmul.f32 %v1377, %v1362
    %v1399 = vmul.f32 %v1381, %v1362
    %v1400 = vmul.f32 %v1385, %v1362
    %v1401 = vmul.f32 %v1389, %v1362
    %v1402 = vmul.f32 %v1393, %v1362
    %v1403 = vadd.f32 %v1293, %v1395
    %v1404 = vadd.f32 %v1294, %v1396
    %v1405 = vadd.f32 %v1295, %v1397
    %v1406 = vadd.f32 %v1296, %v1398
    %v1407 = vadd.f32 %v1297, %v1399
    %v1408 = vadd.f32 %v1298, %v1400
    %v1409 = vadd.f32 %v1299, %v1401
    %v1410 = vadd.f32 %v1300, %v1402
    %1419 = vrot.lane.b32.xlu0 %v1403, 127
    %v1420 = vpop.permute.xlu0 %1419
    %1421 = vrot.lane.b32.xlu0 %v1404, 127
    %v1422 = vpop.permute.xlu0 %1421
    %1423 = vrot.lane.b32.xlu0 %v1405, 127
    %v1424 = vpop.permute.xlu0 %1423
    %1425 = vrot.lane.b32.xlu0 %v1406, 127
    %v1426 = vpop.permute.xlu0 %1425
    %1427 = vrot.lane.b32.xlu0 %v1407, 127
    %v1428 = vpop.permute.xlu0 %1427
    %1429 = vrot.lane.b32.xlu0 %v1408, 127
    %v1430 = vpop.permute.xlu0 %1429
    %1431 = vrot.lane.b32.xlu0 %v1409, 127
    %v1432 = vpop.permute.xlu0 %1431
    %1433 = vrot.lane.b32.xlu0 %v1410, 127
    %v1434 = vpop.permute.xlu0 %1433
    %v1443 = vadd.f32 %v1403, %v1420
    %v1444 = vadd.f32 %v1404, %v1422
    %v1445 = vadd.f32 %v1405, %v1424
    %v1446 = vadd.f32 %v1406, %v1426
    %v1447 = vadd.f32 %v1407, %v1428
    %v1448 = vadd.f32 %v1408, %v1430
    %v1449 = vadd.f32 %v1409, %v1432
    %v1450 = vadd.f32 %v1410, %v1434
    %v1451 = vmul.f32 %v1443, 0.5
    %v1452 = vmul.f32 %v1444, 0.5
    %v1453 = vmul.f32 %v1445, 0.5
    %v1454 = vmul.f32 %v1446, 0.5
    %v1455 = vmul.f32 %v1447, 0.5
    %v1456 = vmul.f32 %v1448, 0.5
    %v1457 = vmul.f32 %v1449, 0.5
    %v1458 = vmul.f32 %v1450, 0.5
    %v1459 = vtanh.pop %v1451
    %v1460 = vtanh.pop %v1452
    %v1461 = vtanh.pop %v1453
    %v1462 = vtanh.pop %v1454
    %v1463 = vtanh.pop %v1455
    %v1464 = vtanh.pop %v1456
    %v1465 = vtanh.pop %v1457
    %v1466 = vtanh.pop %v1458
    %v1467 = vmul.f32 %v1459, 0.5
    %v1468 = vmul.f32 %v1460, 0.5
    %v1469 = vmul.f32 %v1461, 0.5
    %v1470 = vmul.f32 %v1462, 0.5
    %v1471 = vmul.f32 %v1463, 0.5
    %v1472 = vmul.f32 %v1464, 0.5
    %v1473 = vmul.f32 %v1465, 0.5
    %v1474 = vmul.f32 %v1466, 0.5
    %v1475 = vadd.f32 %v1467, 0.5
    %v1476 = vadd.f32 %v1468, 0.5
    %v1477 = vadd.f32 %v1469, 0.5
    %v1478 = vadd.f32 %v1470, 0.5
    %v1479 = vadd.f32 %v1471, 0.5
    %v1480 = vadd.f32 %v1472, 0.5
    %v1481 = vadd.f32 %v1473, 0.5
    %v1482 = vadd.f32 %v1474, 0.5
    %1484 = vset.pattern.permute.xlu0 0
    %1485 = vperm.xlu0 %1484, %v1475
    %v1486 = vpop.permute.xlu0 %1485
    %1489 = vset.pattern.permute.xlu0 0
    %1490 = vperm.xlu0 %1489, %v1476
    %v1491 = vpop.permute.xlu0 %1490
    %1494 = vset.pattern.permute.xlu0 0
    %1495 = vperm.xlu0 %1494, %v1477
    %v1496 = vpop.permute.xlu0 %1495
    %1499 = vset.pattern.permute.xlu0 0
    %1500 = vperm.xlu0 %1499, %v1478
    %v1501 = vpop.permute.xlu0 %1500
    %1504 = vset.pattern.permute.xlu0 0
    %1505 = vperm.xlu0 %1504, %v1479
    %v1506 = vpop.permute.xlu0 %1505
    %1509 = vset.pattern.permute.xlu0 0
    %1510 = vperm.xlu0 %1509, %v1480
    %v1511 = vpop.permute.xlu0 %1510
    %1514 = vset.pattern.permute.xlu0 0
    %1515 = vperm.xlu0 %1514, %v1481
    %v1516 = vpop.permute.xlu0 %1515
    %1519 = vset.pattern.permute.xlu0 0
    %1520 = vperm.xlu0 %1519, %v1482
    %v1521 = vpop.permute.xlu0 %1520
    %v1523 = vmul.f32 %v640, %v1486
    %v1524 = vmul.f32 %v642, %v1486
    %v1525 = vmul.f32 %v646, %v1491
    %v1526 = vmul.f32 %v648, %v1491
    %v1527 = vmul.f32 %v652, %v1496
    %v1528 = vmul.f32 %v654, %v1496
    %v1529 = vmul.f32 %v658, %v1501
    %v1530 = vmul.f32 %v660, %v1501
    %v1531 = vmul.f32 %v664, %v1506
    %v1532 = vmul.f32 %v666, %v1506
    %v1533 = vmul.f32 %v670, %v1511
    %v1534 = vmul.f32 %v672, %v1511
    %v1535 = vmul.f32 %v676, %v1516
    %v1536 = vmul.f32 %v678, %v1516
    %v1537 = vmul.f32 %v682, %v1521
    %v1538 = vmul.f32 %v684, %v1521
    %1539 = vst [vmem:[#allocation5] sm:$0xff] %v1523
    %1540 = vst [vmem:[#allocation5 + $0x8] sm:$0xff] %v1524
    %1541 = vst [vmem:[#allocation5 + $0x10] sm:$0xff] %v1525
    %1542 = vst [vmem:[#allocation5 + $0x18] sm:$0xff] %v1526
    %1543 = vst [vmem:[#allocation5 + $0x20] sm:$0xff] %v1527
    %1544 = vst [vmem:[#allocation5 + $0x28] sm:$0xff] %v1528
    %1545 = vst [vmem:[#allocation5 + $0x30] sm:$0xff] %v1529
    %1546 = vst [vmem:[#allocation5 + $0x38] sm:$0xff] %v1530
    %1547 = vst [vmem:[#allocation5 + $0x40] sm:$0xff] %v1531
    %1548 = vst [vmem:[#allocation5 + $0x48] sm:$0xff] %v1532
    %1549 = vst [vmem:[#allocation5 + $0x50] sm:$0xff] %v1533
    %1550 = vst [vmem:[#allocation5 + $0x58] sm:$0xff] %v1534
    %1551 = vst [vmem:[#allocation5 + $0x60] sm:$0xff] %v1535
    %1552 = vst [vmem:[#allocation5 + $0x68] sm:$0xff] %v1536
    %1553 = vst [vmem:[#allocation5 + $0x70] sm:$0xff] %v1537
    %1554 = vst [vmem:[#allocation5 + $0x78] sm:$0xff] %v1538
    %v1555 = vadd.f32 %v1523, %v1525
    %v1556 = vadd.f32 %v1555, %v1527
    %v1557 = vadd.f32 %v1556, %v1529
    %v1558 = vadd.f32 %v1557, %v1531
    %v1559 = vadd.f32 %v1558, %v1533
    %v1560 = vadd.f32 %v1559, %v1535
    %v1561 = vadd.f32 %v1560, %v1537
    %v1562 = vrot.slane %v1561, 4
    %v1563 = vadd.f32 %v1561, %v1562
    %v1564 = vrot.slane %v1563, 2
    %v1565 = vadd.f32 %v1563, %v1564
    %v1566 = vrot.slane %v1565, 1
    %v1567 = vadd.f32 %v1565, %v1566
    %v1568 = vadd.f32 %v1524, %v1526
    %v1569 = vadd.f32 %v1568, %v1528
    %v1570 = vadd.f32 %v1569, %v1530
    %v1571 = vadd.f32 %v1570, %v1532
    %v1572 = vadd.f32 %v1571, %v1534
    %v1573 = vadd.f32 %v1572, %v1536
    %v1574 = vadd.f32 %v1573, %v1538
    %v1575 = vrot.slane %v1574, 4
    %v1576 = vadd.f32 %v1574, %v1575
    %v1577 = vrot.slane %v1576, 2
    %v1578 = vadd.f32 %v1576, %v1577
    %v1579 = vrot.slane %v1578, 1
    %v1580 = vadd.f32 %v1578, %v1579
    %v1581 = vmul.f32 %v1567, 0.015625
    %v1582 = vmul.f32 %v1580, 0.015625
    %v1583 = vmax.f32 %v1523, %v1527
    %v1584 = vmax.f32 %v1525, %v1529
    %v1585 = vmax.f32 %v1583, %v1531
    %v1586 = vmax.f32 %v1584, %v1533
    %v1587 = vmax.f32 %v1585, %v1535
    %v1588 = vmax.f32 %v1586, %v1537
    %v1589 = vmax.f32 %v1587, %v1588
    %v1590 = vrot.slane %v1589, 4
    %v1591 = vmax.f32 %v1589, %v1590
    %v1592 = vrot.slane %v1591, 2
    %v1593 = vmax.f32 %v1591, %v1592
    %v1594 = vrot.slane %v1593, 1
    %v1595 = vmax.f32 %v1593, %v1594
    %v1596 = vmax.f32 %v1524, %v1528
    %v1597 = vmax.f32 %v1526, %v1530
    %v1598 = vmax.f32 %v1596, %v1532
    %v1599 = vmax.f32 %v1597, %v1534
    %v1600 = vmax.f32 %v1598, %v1536
    %v1601 = vmax.f32 %v1599, %v1538
    %v1602 = vmax.f32 %v1600, %v1601
    %v1603 = vrot.slane %v1602, 4
    %v1604 = vmax.f32 %v1602, %v1603
    %v1605 = vrot.slane %v1604, 2
    %v1606 = vmax.f32 %v1604, %v1605
    %v1607 = vrot.slane %v1606, 1
    %v1608 = vmax.f32 %v1606, %v1607
    %1609 = vset.pattern.permute.xlu0 2
    %1610 = vperm.xlu0 %1609, %v1475
    %v1611 = vpop.permute.xlu0 %1610
    %1613 = vset.pattern.permute.xlu0 2
    %1614 = vperm.xlu0 %1613, %v1476
    %v1615 = vpop.permute.xlu0 %1614
    %1617 = vset.pattern.permute.xlu0 2
    %1618 = vperm.xlu0 %1617, %v1477
    %v1619 = vpop.permute.xlu0 %1618
    %1621 = vset.pattern.permute.xlu0 2
    %1622 = vperm.xlu0 %1621, %v1478
    %v1623 = vpop.permute.xlu0 %1622
    %1625 = vset.pattern.permute.xlu0 2
    %1626 = vperm.xlu0 %1625, %v1479
    %v1627 = vpop.permute.xlu0 %1626
    %1629 = vset.pattern.permute.xlu0 2
    %1630 = vperm.xlu0 %1629, %v1480
    %v1631 = vpop.permute.xlu0 %1630
    %1633 = vset.pattern.permute.xlu0 2
    %1634 = vperm.xlu0 %1633, %v1481
    %v1635 = vpop.permute.xlu0 %1634
    %1637 = vset.pattern.permute.xlu0 2
    %1638 = vperm.xlu0 %1637, %v1482
    %v1639 = vpop.permute.xlu0 %1638
    %v1641 = vmul.f32 %v753, %v1611
    %v1642 = vmul.f32 %v755, %v1611
    %v1643 = vmul.f32 %v759, %v1615
    %v1644 = vmul.f32 %v761, %v1615
    %v1645 = vmul.f32 %v765, %v1619
    %v1646 = vmul.f32 %v767, %v1619
    %v1647 = vmul.f32 %v771, %v1623
    %v1648 = vmul.f32 %v773, %v1623
    %v1649 = vmul.f32 %v777, %v1627
    %v1650 = vmul.f32 %v779, %v1627
    %v1651 = vmul.f32 %v783, %v1631
    %v1652 = vmul.f32 %v785, %v1631
    %v1653 = vmul.f32 %v789, %v1635
    %v1654 = vmul.f32 %v791, %v1635
    %v1655 = vmul.f32 %v795, %v1639
    %v1656 = vmul.f32 %v797, %v1639
    %s1657 = scalar_lea.vmem [#allocation5], 128
    %1658 = vst [vmem:[%s1657] sm:$0xff] %v1641
    %1659 = vst [vmem:[%s1657 + $0x8] sm:$0xff] %v1642
    %1660 = vst [vmem:[%s1657 + $0x10] sm:$0xff] %v1643
    %1661 = vst [vmem:[%s1657 + $0x18] sm:$0xff] %v1644
    %1662 = vst [vmem:[%s1657 + $0x20] sm:$0xff] %v1645
    %1663 = vst [vmem:[%s1657 + $0x28] sm:$0xff] %v1646
    %1664 = vst [vmem:[%s1657 + $0x30] sm:$0xff] %v1647
    %1665 = vst [vmem:[%s1657 + $0x38] sm:$0xff] %v1648
    %1666 = vst [vmem:[%s1657 + $0x40] sm:$0xff] %v1649
    %1667 = vst [vmem:[%s1657 + $0x48] sm:$0xff] %v1650
    %1668 = vst [vmem:[%s1657 + $0x50] sm:$0xff] %v1651
    %1669 = vst [vmem:[%s1657 + $0x58] sm:$0xff] %v1652
    %1670 = vst [vmem:[%s1657 + $0x60] sm:$0xff] %v1653
    %1671 = vst [vmem:[%s1657 + $0x68] sm:$0xff] %v1654
    %1672 = vst [vmem:[%s1657 + $0x70] sm:$0xff] %v1655
    %1673 = vst [vmem:[%s1657 + $0x78] sm:$0xff] %v1656
    %v1674 = vadd.f32 %v1641, %v1643
    %v1675 = vadd.f32 %v1674, %v1645
    %v1676 = vadd.f32 %v1675, %v1647
    %v1677 = vadd.f32 %v1676, %v1649
    %v1678 = vadd.f32 %v1677, %v1651
    %v1679 = vadd.f32 %v1678, %v1653
    %v1680 = vadd.f32 %v1679, %v1655
    %v1681 = vrot.slane %v1680, 4
    %v1682 = vadd.f32 %v1680, %v1681
    %v1683 = vrot.slane %v1682, 2
    %v1684 = vadd.f32 %v1682, %v1683
    %v1685 = vrot.slane %v1684, 1
    %v1686 = vadd.f32 %v1684, %v1685
    %v1687 = vadd.f32 %v1642, %v1644
    %v1688 = vadd.f32 %v1687, %v1646
    %v1689 = vadd.f32 %v1688, %v1648
    %v1690 = vadd.f32 %v1689, %v1650
    %v1691 = vadd.f32 %v1690, %v1652
    %v1692 = vadd.f32 %v1691, %v1654
    %v1693 = vadd.f32 %v1692, %v1656
    %v1694 = vrot.slane %v1693, 4
    %v1695 = vadd.f32 %v1693, %v1694
    %v1696 = vrot.slane %v1695, 2
    %v1697 = vadd.f32 %v1695, %v1696
    %v1698 = vrot.slane %v1697, 1
    %v1699 = vadd.f32 %v1697, %v1698
    %v1700 = vmul.f32 %v1686, 0.015625
    %v1701 = vmul.f32 %v1699, 0.015625
    %v1702 = vmax.f32 %v1641, %v1645
    %v1703 = vmax.f32 %v1643, %v1647
    %v1704 = vmax.f32 %v1702, %v1649
    %v1705 = vmax.f32 %v1703, %v1651
    %v1706 = vmax.f32 %v1704, %v1653
    %v1707 = vmax.f32 %v1705, %v1655
    %v1708 = vmax.f32 %v1706, %v1707
    %v1709 = vrot.slane %v1708, 4
    %v1710 = vmax.f32 %v1708, %v1709
    %v1711 = vrot.slane %v1710, 2
    %v1712 = vmax.f32 %v1710, %v1711
    %v1713 = vrot.slane %v1712, 1
    %v1714 = vmax.f32 %v1712, %v1713
    %v1715 = vmax.f32 %v1642, %v1646
    %v1716 = vmax.f32 %v1644, %v1648
    %v1717 = vmax.f32 %v1715, %v1650
    %v1718 = vmax.f32 %v1716, %v1652
    %v1719 = vmax.f32 %v1717, %v1654
    %v1720 = vmax.f32 %v1718, %v1656
    %v1721 = vmax.f32 %v1719, %v1720
    %v1722 = vrot.slane %v1721, 4
    %v1723 = vmax.f32 %v1721, %v1722
    %v1724 = vrot.slane %v1723, 2
    %v1725 = vmax.f32 %v1723, %v1724
    %v1726 = vrot.slane %v1725, 1
    %v1727 = vmax.f32 %v1725, %v1726
    %vm1728 = vcmask 1040384
    %v1729 = vsel %vm1728, %v1581, %v1700
    %v1730 = vsel %vm1728, %v1582, %v1701
    %v1731 = vsel %vm1728, %v1595, %v1714
    %v1732 = vsel %vm1728, %v1608, %v1727
    %1733 = vrot.lane.b32.xlu0 %v1729, 17
    %v1734 = vpop.permute.xlu0 %1733
    %1735 = vrot.lane.b32.xlu0 %v1730, 17
    %v1736 = vpop.permute.xlu0 %1735
    %v1737 = vlaneseq
    %v1738 = vand.u32 %v1737, 127
    %vm1739 = vcmp.lt.s32.totalorder %v1738, 17
    %v1740 = vsel %vm1739, %v1734, %v1736
    %v1741 = vsel %vm1739, %v1736, %v1734
    %1742 = vrot.lane.b32.xlu0 %v1731, 17
    %v1743 = vpop.permute.xlu0 %1742
    %1744 = vrot.lane.b32.xlu0 %v1732, 17
    %v1745 = vpop.permute.xlu0 %1744
    %v1746 = vsel %vm1739, %v1743, %v1745
    %v1747 = vsel %vm1739, %v1745, %v1743
    %v1748 = vld [vmem:[%s6] ss:$8 sm:$0x3]
    %v1750 = vlaneseq
    %v1751 = vshrl.u32 %v1750, 7
    %v1752 = vsub.s32 0, %v1751
    %v1753 = vrot.slane %v1748, %v1752
    %v1754 = vlaneseq
    %v1755 = vshrl.u32 %v1754, 7
    %v1756 = vsub.s32 1, %v1755
    %v1757 = vrot.slane %v1748, %v1756
    %v1760 = vmul.f32 %v1741, %v1753
    %v1761 = vmul.f32 %v1740, %v1757
    %v1762 = vadd.f32 %v1760, 0.0
    %v1763 = vadd.f32 %v1761, 0.0
    %s1764 = scalar_lea.vmem %s6, 17
    %v1765 = vld [vmem:[%s1764] ss:$8 sm:$0x3]
    %v1767 = vlaneseq
    %v1768 = vshrl.u32 %v1767, 7
    %v1769 = vsub.s32 0, %v1768
    %v1770 = vrot.slane %v1765, %v1769
    %v1771 = vlaneseq
    %v1772 = vshrl.u32 %v1771, 7
    %v1773 = vsub.s32 1, %v1772
    %v1774 = vrot.slane %v1765, %v1773
    %v1777 = vmul.f32 %v1747, %v1770
    %v1778 = vmul.f32 %v1746, %v1774
    %v1779 = vadd.f32 %v1762, %v1777
    %v1780 = vadd.f32 %v1763, %v1778
    %1781 = vrot.lane.b32.xlu0 %v1729, 16
    %v1782 = vpop.permute.xlu0 %1781
    %1783 = vrot.lane.b32.xlu0 %v1730, 16
    %v1784 = vpop.permute.xlu0 %1783
    %vm1785 = vcmp.lt.s32.totalorder %v1738, 16
    %v1786 = vsel %vm1785, %v1782, %v1784
    %v1787 = vsel %vm1785, %v1784, %v1782
    %1788 = vrot.lane.b32.xlu0 %v1731, 16
    %v1789 = vpop.permute.xlu0 %1788
    %1790 = vrot.lane.b32.xlu0 %v1732, 16
    %v1791 = vpop.permute.xlu0 %1790
    %v1792 = vsel %vm1785, %v1789, %v1791
    %v1793 = vsel %vm1785, %v1791, %v1789
    %s1794 = scalar_lea.vmem %s6, 1
    %v1795 = vld [vmem:[%s1794] ss:$8 sm:$0x3]
    %v1797 = vlaneseq
    %v1798 = vshrl.u32 %v1797, 7
    %v1799 = vsub.s32 0, %v1798
    %v1800 = vrot.slane %v1795, %v1799
    %v1801 = vlaneseq
    %v1802 = vshrl.u32 %v1801, 7
    %v1803 = vsub.s32 1, %v1802
    %v1804 = vrot.slane %v1795, %v1803
    %v1807 = vmul.f32 %v1787, %v1800
    %v1808 = vmul.f32 %v1786, %v1804
    %v1809 = vadd.f32 %v1779, %v1807
    %v1810 = vadd.f32 %v1780, %v1808
    %s1811 = scalar_lea.vmem %s6, 18
    %v1812 = vld [vmem:[%s1811] ss:$8 sm:$0x3]
    %v1814 = vlaneseq
    %v1815 = vshrl.u32 %v1814, 7
    %v1816 = vsub.s32 0, %v1815
    %v1817 = vrot.slane %v1812, %v1816
    %v1818 = vlaneseq
    %v1819 = vshrl.u32 %v1818, 7
    %v1820 = vsub.s32 1, %v1819
    %v1821 = vrot.slane %v1812, %v1820
    %v1824 = vmul.f32 %v1793, %v1817
    %v1825 = vmul.f32 %v1792, %v1821
    %v1826 = vadd.f32 %v1809, %v1824
    %v1827 = vadd.f32 %v1810, %v1825
    %1828 = vrot.lane.b32.xlu0 %v1729, 15
    %v1829 = vpop.permute.xlu0 %1828
    %1830 = vrot.lane.b32.xlu0 %v1730, 15
    %v1831 = vpop.permute.xlu0 %1830
    %vm1832 = vcmp.lt.s32.totalorder %v1738, 15
    %v1833 = vsel %vm1832, %v1829, %v1831
    %v1834 = vsel %vm1832, %v1831, %v1829
    %1835 = vrot.lane.b32.xlu0 %v1731, 15
    %v1836 = vpop.permute.xlu0 %1835
    %1837 = vrot.lane.b32.xlu0 %v1732, 15
    %v1838 = vpop.permute.xlu0 %1837
    %v1839 = vsel %vm1832, %v1836, %v1838
    %v1840 = vsel %vm1832, %v1838, %v1836
    %s1841 = scalar_lea.vmem %s6, 2
    %v1842 = vld [vmem:[%s1841] ss:$8 sm:$0x3]
    %v1844 = vlaneseq
    %v1845 = vshrl.u32 %v1844, 7
    %v1846 = vsub.s32 0, %v1845
    %v1847 = vrot.slane %v1842, %v1846
    %v1848 = vlaneseq
    %v1849 = vshrl.u32 %v1848, 7
    %v1850 = vsub.s32 1, %v1849
    %v1851 = vrot.slane %v1842, %v1850
    %v1854 = vmul.f32 %v1834, %v1847
    %v1855 = vmul.f32 %v1833, %v1851
    %v1856 = vadd.f32 %v1826, %v1854
    %v1857 = vadd.f32 %v1827, %v1855
    %s1858 = scalar_lea.vmem %s6, 19
    %v1859 = vld [vmem:[%s1858] ss:$8 sm:$0x3]
    %v1861 = vlaneseq
    %v1862 = vshrl.u32 %v1861, 7
    %v1863 = vsub.s32 0, %v1862
    %v1864 = vrot.slane %v1859, %v1863
    %v1865 = vlaneseq
    %v1866 = vshrl.u32 %v1865, 7
    %v1867 = vsub.s32 1, %v1866
    %v1868 = vrot.slane %v1859, %v1867
    %v1871 = vmul.f32 %v1840, %v1864
    %v1872 = vmul.f32 %v1839, %v1868
    %v1873 = vadd.f32 %v1856, %v1871
    %v1874 = vadd.f32 %v1857, %v1872
    %1875 = vrot.lane.b32.xlu0 %v1729, 1
    %v1876 = vpop.permute.xlu0 %1875
    %1877 = vrot.lane.b32.xlu0 %v1730, 1
    %v1878 = vpop.permute.xlu0 %1877
    %vm1879 = vcmp.lt.s32.totalorder %v1738, 1
    %v1880 = vsel %vm1879, %v1876, %v1878
    %v1881 = vsel %vm1879, %v1878, %v1876
    %1882 = vrot.lane.b32.xlu0 %v1731, 1
    %v1883 = vpop.permute.xlu0 %1882
    %1884 = vrot.lane.b32.xlu0 %v1732, 1
    %v1885 = vpop.permute.xlu0 %1884
    %v1886 = vsel %vm1879, %v1883, %v1885
    %v1887 = vsel %vm1879, %v1885, %v1883
    %s1888 = scalar_lea.vmem %s6, 3
    %v1889 = vld [vmem:[%s1888] ss:$8 sm:$0x3]
    %v1891 = vlaneseq
    %v1892 = vshrl.u32 %v1891, 7
    %v1893 = vsub.s32 0, %v1892
    %v1894 = vrot.slane %v1889, %v1893
    %v1895 = vlaneseq
    %v1896 = vshrl.u32 %v1895, 7
    %v1897 = vsub.s32 1, %v1896
    %v1898 = vrot.slane %v1889, %v1897
    %v1901 = vmul.f32 %v1881, %v1894
    %v1902 = vmul.f32 %v1880, %v1898
    %v1903 = vadd.f32 %v1873, %v1901
    %v1904 = vadd.f32 %v1874, %v1902
    %s1905 = scalar_lea.vmem %s6, 20
    %v1906 = vld [vmem:[%s1905] ss:$8 sm:$0x3]
    %v1908 = vlaneseq
    %v1909 = vshrl.u32 %v1908, 7
    %v1910 = vsub.s32 0, %v1909
    %v1911 = vrot.slane %v1906, %v1910
    %v1912 = vlaneseq
    %v1913 = vshrl.u32 %v1912, 7
    %v1914 = vsub.s32 1, %v1913
    %v1915 = vrot.slane %v1906, %v1914
    %v1918 = vmul.f32 %v1887, %v1911
    %v1919 = vmul.f32 %v1886, %v1915
    %v1920 = vadd.f32 %v1903, %v1918
    %v1921 = vadd.f32 %v1904, %v1919
    %s1922 = scalar_lea.vmem %s6, 4
    %v1923 = vld [vmem:[%s1922] ss:$8 sm:$0x3]
    %v1925 = vlaneseq
    %v1926 = vshrl.u32 %v1925, 7
    %v1927 = vsub.s32 0, %v1926
    %v1928 = vrot.slane %v1923, %v1927
    %v1929 = vlaneseq
    %v1930 = vshrl.u32 %v1929, 7
    %v1931 = vsub.s32 1, %v1930
    %v1932 = vrot.slane %v1923, %v1931
    %v1935 = vmul.f32 %v1729, %v1928
    %v1936 = vmul.f32 %v1730, %v1932
    %v1937 = vadd.f32 %v1920, %v1935
    %v1938 = vadd.f32 %v1921, %v1936
    %s1939 = scalar_lea.vmem %s6, 21
    %v1940 = vld [vmem:[%s1939] ss:$8 sm:$0x3]
    %v1942 = vlaneseq
    %v1943 = vshrl.u32 %v1942, 7
    %v1944 = vsub.s32 0, %v1943
    %v1945 = vrot.slane %v1940, %v1944
    %v1946 = vlaneseq
    %v1947 = vshrl.u32 %v1946, 7
    %v1948 = vsub.s32 1, %v1947
    %v1949 = vrot.slane %v1940, %v1948
    %v1952 = vmul.f32 %v1731, %v1945
    %v1953 = vmul.f32 %v1732, %v1949
    %v1954 = vadd.f32 %v1937, %v1952
    %v1955 = vadd.f32 %v1938, %v1953
    %1956 = vrot.lane.b32.xlu0 %v1729, 127
    %v1957 = vpop.permute.xlu0 %1956
    %1958 = vrot.lane.b32.xlu0 %v1730, 127
    %v1959 = vpop.permute.xlu0 %1958
    %vm1960 = vcmp.lt.s32.totalorder %v1738, 127
    %v1961 = vsel %vm1960, %v1957, %v1959
    %v1962 = vsel %vm1960, %v1959, %v1957
    %1963 = vrot.lane.b32.xlu0 %v1731, 127
    %v1964 = vpop.permute.xlu0 %1963
    %1965 = vrot.lane.b32.xlu0 %v1732, 127
    %v1966 = vpop.permute.xlu0 %1965
    %v1967 = vsel %vm1960, %v1964, %v1966
    %v1968 = vsel %vm1960, %v1966, %v1964
    %s1969 = scalar_lea.vmem %s6, 5
    %v1970 = vld [vmem:[%s1969] ss:$8 sm:$0x3]
    %v1972 = vlaneseq
    %v1973 = vshrl.u32 %v1972, 7
    %v1974 = vsub.s32 0, %v1973
    %v1975 = vrot.slane %v1970, %v1974
    %v1976 = vlaneseq
    %v1977 = vshrl.u32 %v1976, 7
    %v1978 = vsub.s32 1, %v1977
    %v1979 = vrot.slane %v1970, %v1978
    %v1982 = vmul.f32 %v1961, %v1975
    %v1983 = vmul.f32 %v1962, %v1979
    %v1984 = vadd.f32 %v1954, %v1982
    %v1985 = vadd.f32 %v1955, %v1983
    %s1986 = scalar_lea.vmem %s6, 22
    %v1987 = vld [vmem:[%s1986] ss:$8 sm:$0x3]
    %v1989 = vlaneseq
    %v1990 = vshrl.u32 %v1989, 7
    %v1991 = vsub.s32 0, %v1990
    %v1992 = vrot.slane %v1987, %v1991
    %v1993 = vlaneseq
    %v1994 = vshrl.u32 %v1993, 7
    %v1995 = vsub.s32 1, %v1994
    %v1996 = vrot.slane %v1987, %v1995
    %v1999 = vmul.f32 %v1967, %v1992
    %v2000 = vmul.f32 %v1968, %v1996
    %v2001 = vadd.f32 %v1984, %v1999
    %v2002 = vadd.f32 %v1985, %v2000
    %2003 = vrot.lane.b32.xlu0 %v1729, 113
    %v2004 = vpop.permute.xlu0 %2003
    %2005 = vrot.lane.b32.xlu0 %v1730, 113
    %v2006 = vpop.permute.xlu0 %2005
    %vm2007 = vcmp.lt.s32.totalorder %v1738, 113
    %v2008 = vsel %vm2007, %v2004, %v2006
    %v2009 = vsel %vm2007, %v2006, %v2004
    %2010 = vrot.lane.b32.xlu0 %v1731, 113
    %v2011 = vpop.permute.xlu0 %2010
    %2012 = vrot.lane.b32.xlu0 %v1732, 113
    %v2013 = vpop.permute.xlu0 %2012
    %v2014 = vsel %vm2007, %v2011, %v2013
    %v2015 = vsel %vm2007, %v2013, %v2011
    %s2016 = scalar_lea.vmem %s6, 6
    %v2017 = vld [vmem:[%s2016] ss:$8 sm:$0x3]
    %v2019 = vlaneseq
    %v2020 = vshrl.u32 %v2019, 7
    %v2021 = vsub.s32 0, %v2020
    %v2022 = vrot.slane %v2017, %v2021
    %v2023 = vlaneseq
    %v2024 = vshrl.u32 %v2023, 7
    %v2025 = vsub.s32 1, %v2024
    %v2026 = vrot.slane %v2017, %v2025
    %v2029 = vmul.f32 %v2008, %v2022
    %v2030 = vmul.f32 %v2009, %v2026
    %v2031 = vadd.f32 %v2001, %v2029
    %v2032 = vadd.f32 %v2002, %v2030
    %s2033 = scalar_lea.vmem %s6, 23
    %v2034 = vld [vmem:[%s2033] ss:$8 sm:$0x3]
    %v2036 = vlaneseq
    %v2037 = vshrl.u32 %v2036, 7
    %v2038 = vsub.s32 0, %v2037
    %v2039 = vrot.slane %v2034, %v2038
    %v2040 = vlaneseq
    %v2041 = vshrl.u32 %v2040, 7
    %v2042 = vsub.s32 1, %v2041
    %v2043 = vrot.slane %v2034, %v2042
    %v2046 = vmul.f32 %v2014, %v2039
    %v2047 = vmul.f32 %v2015, %v2043
    %v2048 = vadd.f32 %v2031, %v2046
    %v2049 = vadd.f32 %v2032, %v2047
    %2050 = vrot.lane.b32.xlu0 %v1729, 112
    %v2051 = vpop.permute.xlu0 %2050
    %2052 = vrot.lane.b32.xlu0 %v1730, 112
    %v2053 = vpop.permute.xlu0 %2052
    %vm2054 = vcmp.lt.s32.totalorder %v1738, 112
    %v2055 = vsel %vm2054, %v2051, %v2053
    %v2056 = vsel %vm2054, %v2053, %v2051
    %2057 = vrot.lane.b32.xlu0 %v1731, 112
    %v2058 = vpop.permute.xlu0 %2057
    %2059 = vrot.lane.b32.xlu0 %v1732, 112
    %v2060 = vpop.permute.xlu0 %2059
    %v2061 = vsel %vm2054, %v2058, %v2060
    %v2062 = vsel %vm2054, %v2060, %v2058
    %s2063 = scalar_lea.vmem %s6, 7
    %v2064 = vld [vmem:[%s2063] ss:$8 sm:$0x3]
    %v2066 = vlaneseq
    %v2067 = vshrl.u32 %v2066, 7
    %v2068 = vsub.s32 0, %v2067
    %v2069 = vrot.slane %v2064, %v2068
    %v2070 = vlaneseq
    %v2071 = vshrl.u32 %v2070, 7
    %v2072 = vsub.s32 1, %v2071
    %v2073 = vrot.slane %v2064, %v2072
    %v2076 = vmul.f32 %v2055, %v2069
    %v2077 = vmul.f32 %v2056, %v2073
    %v2078 = vadd.f32 %v2048, %v2076
    %v2079 = vadd.f32 %v2049, %v2077
    %s2080 = scalar_lea.vmem %s6, 32
    %v2081 = vld [vmem:[%s2080] ss:$8 sm:$0x3]
    %v2083 = vlaneseq
    %v2084 = vshrl.u32 %v2083, 7
    %v2085 = vsub.s32 0, %v2084
    %v2086 = vrot.slane %v2081, %v2085
    %v2087 = vlaneseq
    %v2088 = vshrl.u32 %v2087, 7
    %v2089 = vsub.s32 1, %v2088
    %v2090 = vrot.slane %v2081, %v2089
    %v2093 = vmul.f32 %v2061, %v2086
    %v2094 = vmul.f32 %v2062, %v2090
    %v2095 = vadd.f32 %v2078, %v2093
    %v2096 = vadd.f32 %v2079, %v2094
    %2097 = vrot.lane.b32.xlu0 %v1729, 111
    %v2098 = vpop.permute.xlu0 %2097
    %2099 = vrot.lane.b32.xlu0 %v1730, 111
    %v2100 = vpop.permute.xlu0 %2099
    %vm2101 = vcmp.lt.s32.totalorder %v1738, 111
    %v2102 = vsel %vm2101, %v2098, %v2100
    %v2103 = vsel %vm2101, %v2100, %v2098
    %2104 = vrot.lane.b32.xlu0 %v1731, 111
    %v2105 = vpop.permute.xlu0 %2104
    %2106 = vrot.lane.b32.xlu0 %v1732, 111
    %v2107 = vpop.permute.xlu0 %2106
    %v2108 = vsel %vm2101, %v2105, %v2107
    %v2109 = vsel %vm2101, %v2107, %v2105
    %s2110 = scalar_lea.vmem %s6, 16
    %v2111 = vld [vmem:[%s2110] ss:$8 sm:$0x3]
    %v2113 = vlaneseq
    %v2114 = vshrl.u32 %v2113, 7
    %v2115 = vsub.s32 0, %v2114
    %v2116 = vrot.slane %v2111, %v2115
    %v2117 = vlaneseq
    %v2118 = vshrl.u32 %v2117, 7
    %v2119 = vsub.s32 1, %v2118
    %v2120 = vrot.slane %v2111, %v2119
    %v2123 = vmul.f32 %v2102, %v2116
    %v2124 = vmul.f32 %v2103, %v2120
    %v2125 = vadd.f32 %v2095, %v2123
    %v2126 = vadd.f32 %v2096, %v2124
    %s2127 = scalar_lea.vmem %s6, 33
    %v2128 = vld [vmem:[%s2127] ss:$8 sm:$0x3]
    %v2130 = vlaneseq
    %v2131 = vshrl.u32 %v2130, 7
    %v2132 = vsub.s32 0, %v2131
    %v2133 = vrot.slane %v2128, %v2132
    %v2134 = vlaneseq
    %v2135 = vshrl.u32 %v2134, 7
    %v2136 = vsub.s32 1, %v2135
    %v2137 = vrot.slane %v2128, %v2136
    %v2140 = vmul.f32 %v2108, %v2133
    %v2141 = vmul.f32 %v2109, %v2137
    %v2142 = vadd.f32 %v2125, %v2140
    %v2143 = vadd.f32 %v2126, %v2141
    %v2144 = vmul.f32 %v2142, 0.5
    %v2145 = vmul.f32 %v2143, 0.5
    %v2146 = vtanh.pop %v2144
    %v2147 = vtanh.pop %v2145
    %v2148 = vmul.f32 %v2146, 0.5
    %v2149 = vmul.f32 %v2147, 0.5
    %v2150 = vadd.f32 %v2148, 0.5
    %v2151 = vadd.f32 %v2149, 0.5
    %v2152 = vld [vmem:[#allocation5] sm:$0xff]
    %v2153 = vld [vmem:[#allocation5 + $0x8] sm:$0xff]
    %v2154 = vld [vmem:[#allocation5 + $0x10] sm:$0xff]
    %v2155 = vld [vmem:[#allocation5 + $0x18] sm:$0xff]
    %v2156 = vld [vmem:[#allocation5 + $0x20] sm:$0xff]
    %v2157 = vld [vmem:[#allocation5 + $0x28] sm:$0xff]
    %v2158 = vld [vmem:[#allocation5 + $0x30] sm:$0xff]
    %v2159 = vld [vmem:[#allocation5 + $0x38] sm:$0xff]
    %v2160 = vld [vmem:[#allocation5 + $0x40] sm:$0xff]
    %v2161 = vld [vmem:[#allocation5 + $0x48] sm:$0xff]
    %v2162 = vld [vmem:[#allocation5 + $0x50] sm:$0xff]
    %v2163 = vld [vmem:[#allocation5 + $0x58] sm:$0xff]
    %v2164 = vld [vmem:[#allocation5 + $0x60] sm:$0xff]
    %v2165 = vld [vmem:[#allocation5 + $0x68] sm:$0xff]
    %v2166 = vld [vmem:[#allocation5 + $0x70] sm:$0xff]
    %v2167 = vld [vmem:[#allocation5 + $0x78] sm:$0xff]
    %v2168 = vlaneseq
    %v2169 = vshrl.u32 %v2168, 7
    %v2170 = vsub.s32 0, %v2169
    %v2171 = vrot.slane %v2150, %v2170
    %v2172 = vlaneseq
    %v2173 = vshrl.u32 %v2172, 7
    %v2174 = vsub.s32 0, %v2173
    %v2175 = vrot.slane %v2151, %v2174
    %v2176 = vmul.f32 %v2152, %v2171
    %v2177 = vmul.f32 %v2153, %v2175
    %v2178 = vmul.f32 %v2154, %v2171
    %v2179 = vmul.f32 %v2155, %v2175
    %v2180 = vmul.f32 %v2156, %v2171
    %v2181 = vmul.f32 %v2157, %v2175
    %v2182 = vmul.f32 %v2158, %v2171
    %v2183 = vmul.f32 %v2159, %v2175
    %v2184 = vmul.f32 %v2160, %v2171
    %v2185 = vmul.f32 %v2161, %v2175
    %v2186 = vmul.f32 %v2162, %v2171
    %v2187 = vmul.f32 %v2163, %v2175
    %v2188 = vmul.f32 %v2164, %v2171
    %v2189 = vmul.f32 %v2165, %v2175
    %v2190 = vmul.f32 %v2166, %v2171
    %v2191 = vmul.f32 %v2167, %v2175
    %v2192 = vld [vmem:[#allocation2] sm:$0xff]
    %v2193 = vld [vmem:[#allocation2 + $0x8] sm:$0xff]
    %v2194 = vld [vmem:[#allocation2 + $0x10] sm:$0xff]
    %v2195 = vld [vmem:[#allocation2 + $0x18] sm:$0xff]
    %v2196 = vld [vmem:[#allocation2 + $0x20] sm:$0xff]
    %v2197 = vld [vmem:[#allocation2 + $0x28] sm:$0xff]
    %v2198 = vld [vmem:[#allocation2 + $0x30] sm:$0xff]
    %v2199 = vld [vmem:[#allocation2 + $0x38] sm:$0xff]
    %v2200 = vld [vmem:[#allocation2 + $0x40] sm:$0xff]
    %v2201 = vld [vmem:[#allocation2 + $0x48] sm:$0xff]
    %v2202 = vld [vmem:[#allocation2 + $0x50] sm:$0xff]
    %v2203 = vld [vmem:[#allocation2 + $0x58] sm:$0xff]
    %v2204 = vld [vmem:[#allocation2 + $0x60] sm:$0xff]
    %v2205 = vld [vmem:[#allocation2 + $0x68] sm:$0xff]
    %v2206 = vld [vmem:[#allocation2 + $0x70] sm:$0xff]
    %v2207 = vld [vmem:[#allocation2 + $0x78] sm:$0xff]
    %v2208 = vadd.f32 %v2176, %v2192
    %v2209 = vadd.f32 %v2177, %v2193
    %v2210 = vadd.f32 %v2178, %v2194
    %v2211 = vadd.f32 %v2179, %v2195
    %v2212 = vadd.f32 %v2180, %v2196
    %v2213 = vadd.f32 %v2181, %v2197
    %v2214 = vadd.f32 %v2182, %v2198
    %v2215 = vadd.f32 %v2183, %v2199
    %v2216 = vadd.f32 %v2184, %v2200
    %v2217 = vadd.f32 %v2185, %v2201
    %v2218 = vadd.f32 %v2186, %v2202
    %v2219 = vadd.f32 %v2187, %v2203
    %v2220 = vadd.f32 %v2188, %v2204
    %v2221 = vadd.f32 %v2189, %v2205
    %v2222 = vadd.f32 %v2190, %v2206
    %v2223 = vadd.f32 %v2191, %v2207
    %v2224 = vmul.f32 %v2208, 0.5
    %v2225 = vmul.f32 %v2209, 0.5
    %v2226 = vmul.f32 %v2210, 0.5
    %v2227 = vmul.f32 %v2211, 0.5
    %v2228 = vmul.f32 %v2212, 0.5
    %v2229 = vmul.f32 %v2213, 0.5
    %v2230 = vmul.f32 %v2214, 0.5
    %v2231 = vmul.f32 %v2215, 0.5
    %v2232 = vmul.f32 %v2216, 0.5
    %v2233 = vmul.f32 %v2217, 0.5
    %v2234 = vmul.f32 %v2218, 0.5
    %v2235 = vmul.f32 %v2219, 0.5
    %v2236 = vmul.f32 %v2220, 0.5
    %v2237 = vmul.f32 %v2221, 0.5
    %v2238 = vmul.f32 %v2222, 0.5
    %v2239 = vmul.f32 %v2223, 0.5
    %v2240 = vtanh.pop %v2224
    %v2241 = vtanh.pop %v2225
    %v2242 = vtanh.pop %v2226
    %v2243 = vtanh.pop %v2227
    %v2244 = vtanh.pop %v2228
    %v2245 = vtanh.pop %v2229
    %v2246 = vtanh.pop %v2230
    %v2247 = vtanh.pop %v2231
    %v2248 = vtanh.pop %v2232
    %v2249 = vtanh.pop %v2233
    %v2250 = vtanh.pop %v2234
    %v2251 = vtanh.pop %v2235
    %v2252 = vtanh.pop %v2236
    %v2253 = vtanh.pop %v2237
    %v2254 = vtanh.pop %v2238
    %v2255 = vtanh.pop %v2239
    %v2256 = vmul.f32 %v2240, 0.5
    %v2257 = vmul.f32 %v2241, 0.5
    %v2258 = vmul.f32 %v2242, 0.5
    %v2259 = vmul.f32 %v2243, 0.5
    %v2260 = vmul.f32 %v2244, 0.5
    %v2261 = vmul.f32 %v2245, 0.5
    %v2262 = vmul.f32 %v2246, 0.5
    %v2263 = vmul.f32 %v2247, 0.5
    %v2264 = vmul.f32 %v2248, 0.5
    %v2265 = vmul.f32 %v2249, 0.5
    %v2266 = vmul.f32 %v2250, 0.5
    %v2267 = vmul.f32 %v2251, 0.5
    %v2268 = vmul.f32 %v2252, 0.5
    %v2269 = vmul.f32 %v2253, 0.5
    %v2270 = vmul.f32 %v2254, 0.5
    %v2271 = vmul.f32 %v2255, 0.5
    %v2272 = vadd.f32 %v2256, 0.5
    %v2273 = vadd.f32 %v2257, 0.5
    %v2274 = vadd.f32 %v2258, 0.5
    %v2275 = vadd.f32 %v2259, 0.5
    %v2276 = vadd.f32 %v2260, 0.5
    %v2277 = vadd.f32 %v2261, 0.5
    %v2278 = vadd.f32 %v2262, 0.5
    %v2279 = vadd.f32 %v2263, 0.5
    %v2280 = vadd.f32 %v2264, 0.5
    %v2281 = vadd.f32 %v2265, 0.5
    %v2282 = vadd.f32 %v2266, 0.5
    %v2283 = vadd.f32 %v2267, 0.5
    %v2284 = vadd.f32 %v2268, 0.5
    %v2285 = vadd.f32 %v2269, 0.5
    %v2286 = vadd.f32 %v2270, 0.5
    %v2287 = vadd.f32 %v2271, 0.5
    %2288 = vst [vmem:[#allocation5] sm:$0xff] %v2272
    %2289 = vst [vmem:[#allocation5 + $0x8] sm:$0xff] %v2273
    %2290 = vst [vmem:[#allocation5 + $0x10] sm:$0xff] %v2274
    %2291 = vst [vmem:[#allocation5 + $0x18] sm:$0xff] %v2275
    %2292 = vst [vmem:[#allocation5 + $0x20] sm:$0xff] %v2276
    %2293 = vst [vmem:[#allocation5 + $0x28] sm:$0xff] %v2277
    %2294 = vst [vmem:[#allocation5 + $0x30] sm:$0xff] %v2278
    %2295 = vst [vmem:[#allocation5 + $0x38] sm:$0xff] %v2279
    %2296 = vst [vmem:[#allocation5 + $0x40] sm:$0xff] %v2280
    %2297 = vst [vmem:[#allocation5 + $0x48] sm:$0xff] %v2281
    %2298 = vst [vmem:[#allocation5 + $0x50] sm:$0xff] %v2282
    %2299 = vst [vmem:[#allocation5 + $0x58] sm:$0xff] %v2283
    %2300 = vst [vmem:[#allocation5 + $0x60] sm:$0xff] %v2284
    %2301 = vst [vmem:[#allocation5 + $0x68] sm:$0xff] %v2285
    %2302 = vst [vmem:[#allocation5 + $0x70] sm:$0xff] %v2286
    %2303 = vst [vmem:[#allocation5 + $0x78] sm:$0xff] %v2287
    %v2304 = vld [vmem:[%s1657] sm:$0xff]
    %v2305 = vld [vmem:[%s1657 + $0x8] sm:$0xff]
    %v2306 = vld [vmem:[%s1657 + $0x10] sm:$0xff]
    %v2307 = vld [vmem:[%s1657 + $0x18] sm:$0xff]
    %v2308 = vld [vmem:[%s1657 + $0x20] sm:$0xff]
    %v2309 = vld [vmem:[%s1657 + $0x28] sm:$0xff]
    %v2310 = vld [vmem:[%s1657 + $0x30] sm:$0xff]
    %v2311 = vld [vmem:[%s1657 + $0x38] sm:$0xff]
    %v2312 = vld [vmem:[%s1657 + $0x40] sm:$0xff]
    %v2313 = vld [vmem:[%s1657 + $0x48] sm:$0xff]
    %v2314 = vld [vmem:[%s1657 + $0x50] sm:$0xff]
    %v2315 = vld [vmem:[%s1657 + $0x58] sm:$0xff]
    %v2316 = vld [vmem:[%s1657 + $0x60] sm:$0xff]
    %v2317 = vld [vmem:[%s1657 + $0x68] sm:$0xff]
    %v2318 = vld [vmem:[%s1657 + $0x70] sm:$0xff]
    %v2319 = vld [vmem:[%s1657 + $0x78] sm:$0xff]
    %v2320 = vlaneseq
    %v2321 = vshrl.u32 %v2320, 7
    %v2322 = vsub.s32 1, %v2321
    %v2323 = vrot.slane %v2150, %v2322
    %v2324 = vlaneseq
    %v2325 = vshrl.u32 %v2324, 7
    %v2326 = vsub.s32 1, %v2325
    %v2327 = vrot.slane %v2151, %v2326
    %v2328 = vmul.f32 %v2304, %v2323
    %v2329 = vmul.f32 %v2305, %v2327
    %v2330 = vmul.f32 %v2306, %v2323
    %v2331 = vmul.f32 %v2307, %v2327
    %v2332 = vmul.f32 %v2308, %v2323
    %v2333 = vmul.f32 %v2309, %v2327
    %v2334 = vmul.f32 %v2310, %v2323
    %v2335 = vmul.f32 %v2311, %v2327
    %v2336 = vmul.f32 %v2312, %v2323
    %v2337 = vmul.f32 %v2313, %v2327
    %v2338 = vmul.f32 %v2314, %v2323
    %v2339 = vmul.f32 %v2315, %v2327
    %v2340 = vmul.f32 %v2316, %v2323
    %v2341 = vmul.f32 %v2317, %v2327
    %v2342 = vmul.f32 %v2318, %v2323
    %v2343 = vmul.f32 %v2319, %v2327
    %v2344 = vld [vmem:[%s57] sm:$0xff]
    %v2345 = vld [vmem:[%s57 + $0x8] sm:$0xff]
    %v2346 = vld [vmem:[%s57 + $0x10] sm:$0xff]
    %v2347 = vld [vmem:[%s57 + $0x18] sm:$0xff]
    %v2348 = vld [vmem:[%s57 + $0x20] sm:$0xff]
    %v2349 = vld [vmem:[%s57 + $0x28] sm:$0xff]
    %v2350 = vld [vmem:[%s57 + $0x30] sm:$0xff]
    %v2351 = vld [vmem:[%s57 + $0x38] sm:$0xff]
    %v2352 = vld [vmem:[%s57 + $0x40] sm:$0xff]
    %v2353 = vld [vmem:[%s57 + $0x48] sm:$0xff]
    %v2354 = vld [vmem:[%s57 + $0x50] sm:$0xff]
    %v2355 = vld [vmem:[%s57 + $0x58] sm:$0xff]
    %v2356 = vld [vmem:[%s57 + $0x60] sm:$0xff]
    %v2357 = vld [vmem:[%s57 + $0x68] sm:$0xff]
    %v2358 = vld [vmem:[%s57 + $0x70] sm:$0xff]
    %v2359 = vld [vmem:[%s57 + $0x78] sm:$0xff]
    %v2360 = vadd.f32 %v2328, %v2344
    %v2361 = vadd.f32 %v2329, %v2345
    %v2362 = vadd.f32 %v2330, %v2346
    %v2363 = vadd.f32 %v2331, %v2347
    %v2364 = vadd.f32 %v2332, %v2348
    %v2365 = vadd.f32 %v2333, %v2349
    %v2366 = vadd.f32 %v2334, %v2350
    %v2367 = vadd.f32 %v2335, %v2351
    %v2368 = vadd.f32 %v2336, %v2352
    %v2369 = vadd.f32 %v2337, %v2353
    %v2370 = vadd.f32 %v2338, %v2354
    %v2371 = vadd.f32 %v2339, %v2355
    %v2372 = vadd.f32 %v2340, %v2356
    %v2373 = vadd.f32 %v2341, %v2357
    %v2374 = vadd.f32 %v2342, %v2358
    %v2375 = vadd.f32 %v2343, %v2359
    %v2376 = vmul.f32 %v2360, 0.5
    %v2377 = vmul.f32 %v2361, 0.5
    %v2378 = vmul.f32 %v2362, 0.5
    %v2379 = vmul.f32 %v2363, 0.5
    %v2380 = vmul.f32 %v2364, 0.5
    %v2381 = vmul.f32 %v2365, 0.5
    %v2382 = vmul.f32 %v2366, 0.5
    %v2383 = vmul.f32 %v2367, 0.5
    %v2384 = vmul.f32 %v2368, 0.5
    %v2385 = vmul.f32 %v2369, 0.5
    %v2386 = vmul.f32 %v2370, 0.5
    %v2387 = vmul.f32 %v2371, 0.5
    %v2388 = vmul.f32 %v2372, 0.5
    %v2389 = vmul.f32 %v2373, 0.5
    %v2390 = vmul.f32 %v2374, 0.5
    %v2391 = vmul.f32 %v2375, 0.5
    %v2392 = vtanh.pop %v2376
    %v2393 = vtanh.pop %v2377
    %v2394 = vtanh.pop %v2378
    %v2395 = vtanh.pop %v2379
    %v2396 = vtanh.pop %v2380
    %v2397 = vtanh.pop %v2381
    %v2398 = vtanh.pop %v2382
    %v2399 = vtanh.pop %v2383
    %v2400 = vtanh.pop %v2384
    %v2401 = vtanh.pop %v2385
    %v2402 = vtanh.pop %v2386
    %v2403 = vtanh.pop %v2387
    %v2404 = vtanh.pop %v2388
    %v2405 = vtanh.pop %v2389
    %v2406 = vtanh.pop %v2390
    %v2407 = vtanh.pop %v2391
    %v2408 = vmul.f32 %v2392, 0.5
    %v2409 = vmul.f32 %v2393, 0.5
    %v2410 = vmul.f32 %v2394, 0.5
    %v2411 = vmul.f32 %v2395, 0.5
    %v2412 = vmul.f32 %v2396, 0.5
    %v2413 = vmul.f32 %v2397, 0.5
    %v2414 = vmul.f32 %v2398, 0.5
    %v2415 = vmul.f32 %v2399, 0.5
    %v2416 = vmul.f32 %v2400, 0.5
    %v2417 = vmul.f32 %v2401, 0.5
    %v2418 = vmul.f32 %v2402, 0.5
    %v2419 = vmul.f32 %v2403, 0.5
    %v2420 = vmul.f32 %v2404, 0.5
    %v2421 = vmul.f32 %v2405, 0.5
    %v2422 = vmul.f32 %v2406, 0.5
    %v2423 = vmul.f32 %v2407, 0.5
    %v2424 = vadd.f32 %v2408, 0.5
    %v2425 = vadd.f32 %v2409, 0.5
    %v2426 = vadd.f32 %v2410, 0.5
    %v2427 = vadd.f32 %v2411, 0.5
    %v2428 = vadd.f32 %v2412, 0.5
    %v2429 = vadd.f32 %v2413, 0.5
    %v2430 = vadd.f32 %v2414, 0.5
    %v2431 = vadd.f32 %v2415, 0.5
    %v2432 = vadd.f32 %v2416, 0.5
    %v2433 = vadd.f32 %v2417, 0.5
    %v2434 = vadd.f32 %v2418, 0.5
    %v2435 = vadd.f32 %v2419, 0.5
    %v2436 = vadd.f32 %v2420, 0.5
    %v2437 = vadd.f32 %v2421, 0.5
    %v2438 = vadd.f32 %v2422, 0.5
    %v2439 = vadd.f32 %v2423, 0.5
    %2440 = vst [vmem:[%s1657] sm:$0xff] %v2424
    %2441 = vst [vmem:[%s1657 + $0x8] sm:$0xff] %v2425
    %2442 = vst [vmem:[%s1657 + $0x10] sm:$0xff] %v2426
    %2443 = vst [vmem:[%s1657 + $0x18] sm:$0xff] %v2427
    %2444 = vst [vmem:[%s1657 + $0x20] sm:$0xff] %v2428
    %2445 = vst [vmem:[%s1657 + $0x28] sm:$0xff] %v2429
    %2446 = vst [vmem:[%s1657 + $0x30] sm:$0xff] %v2430
    %2447 = vst [vmem:[%s1657 + $0x38] sm:$0xff] %v2431
    %2448 = vst [vmem:[%s1657 + $0x40] sm:$0xff] %v2432
    %2449 = vst [vmem:[%s1657 + $0x48] sm:$0xff] %v2433
    %2450 = vst [vmem:[%s1657 + $0x50] sm:$0xff] %v2434
    %2451 = vst [vmem:[%s1657 + $0x58] sm:$0xff] %v2435
    %2452 = vst [vmem:[%s1657 + $0x60] sm:$0xff] %v2436
    %2453 = vst [vmem:[%s1657 + $0x68] sm:$0xff] %v2437
    %2454 = vst [vmem:[%s1657 + $0x70] sm:$0xff] %v2438
    %2455 = vst [vmem:[%s1657 + $0x78] sm:$0xff] %v2439
    // Predicated region
    $region34: #{tpu_custom_call.1} parent=1 // pred_check
      _
    $region35: #{tpu_custom_call.1} parent=1 // pred_check_branch
      %2457 = sbr.rel (0) target = $region37
    $region36: #{tpu_custom_call.1} parent=1 // pred_region
      %s2459 = ssub.s32 4096, 4096
      %2460 = vsyncadd [#allocation4], %s2459
      %s2461 = sshll.u32 [#allocation5], 4
      %s2462 = int_to_ptr.vmem [resolvable:$true] %s2461
      %2467 = dma.vmem_to_hbm [thread:$0]  %s2462, 4096, %s7, [#allocation4], 256, 256, 16
    $region37: #{tpu_custom_call.1} parent=1 // pred_fallthru
      _
    // Predicated region
    $region38: #{tpu_custom_call.1} parent=1 // pred_check
      _
    $region39: #{tpu_custom_call.1} parent=1 // pred_check_branch
      %2469 = sbr.rel (0) target = $region41
    $region40: #{tpu_custom_call.1} parent=1 // pred_region
      %2470 = dma.done [#allocation4], 4096
    $region41: #{tpu_custom_call.1} parent=1 // pred_fallthru
      _
    %2471 = vsyncpa [#allocation3], 1
    %2472 = vsyncpa [#allocation4], 1

</llo_original>
